<compile_context>
chip_gen: v6e
topology: v6e:2x2x1
jax: 0.10.0
libtpu: 0.0.40
codegen_flags: <defaults>
</compile_context>

<pallas_src>
import functools

import jax
import jax.numpy as jnp
from jax import lax
from jax.experimental import pallas as pl
from jax.experimental.pallas import tpu as pltpu  # noqa: F401  (TPU backend)


# ---------------- config (mirrors the torch `config` object) ----------------
N_EMBD = 32        # config.n_embd
BLOCK_SIZE = 8     # config.block_size (== T below)
N_HEADS = 4
HEAD_SIZE = N_EMBD // N_HEADS   # 8
N_HIDDEN = 4 * N_EMBD           # 128 (FeedForward hidden)
DROPOUT_P = 0.0                 # config.dp (identity at inference)
LN_EPS = 1e-5                   # torch.nn.LayerNorm default


def _layernorm(h, g, b):
    """LayerNorm over the last dim (biased variance, PyTorch semantics)."""
    mu = jnp.mean(h, axis=-1, keepdims=True)
    var = jnp.mean((h - mu) ** 2, axis=-1, keepdims=True)
    return (h - mu) * lax.rsqrt(var + LN_EPS) * g + b


def block_kernel(x_ref, g1_ref, b1_ref, wqkv_ref, bqkv_ref, wp_ref, bp_ref,
                 g2_ref, b2_ref, w1_ref, b1f_ref, w2_ref, b2f_ref, o_ref,
                 *, n_heads):
    """Entire transformer Block for the whole (B, T, C) input in one step."""
    B, T, C = x_ref.shape
    H = n_heads
    HS = C // H

    x = x_ref[...].reshape(B * T, C)                       # (BT, C) f32

    # ---------------- LayerNorm 1 + fused QKV projection --------------------
    h1 = _layernorm(x, g1_ref[...], b1_ref[...])           # (BT, C)
    qkv = jnp.dot(h1, wqkv_ref[...],
                  preferred_element_type=jnp.float32) + bqkv_ref[...]  # (BT, 3C)

    # causal additive mask (TPU-friendly 2-D iota); finite negative -> exp()==0
    rows = lax.broadcasted_iota(jnp.int32, (T, T), 0)
    cols = lax.broadcasted_iota(jnp.int32, (T, T), 1)
    neg_mask = jnp.where(cols <= rows, 0.0, -1e30).astype(jnp.float32)

    scale = 1.0 / (float(C) ** 0.5)   # reference divides by sqrt(n_embd), not sqrt(head_size)
    wp = wp_ref[...]                  # (C, C) == Wproj^T

    # Per-head attention (H == 4, static unrolled loop), batched over B.
    # Heads are folded straight into the output projection:
    #   concat_h(o_h) @ Wp^T == sum_h o_h @ Wp^T[h*HS:(h+1)*HS, :]
    # so no concatenate / column-sliced stores are needed.
    proj = jnp.zeros((B * T, C), jnp.float32)
    for h in range(H):
        qh = qkv[:, 0 * C + h * HS: 0 * C + (h + 1) * HS].reshape(B, T, HS)
        kh = qkv[:, 1 * C + h * HS: 1 * C + (h + 1) * HS].reshape(B, T, HS)
        vh = qkv[:, 2 * C + h * HS: 2 * C + (h + 1) * HS].reshape(B, T, HS)

        s = jnp.einsum('bqd,bkd->bqk', qh, kh,
                       preferred_element_type=jnp.float32) * scale + neg_mask
        s = s - jnp.max(s, axis=-1, keepdims=True)
        e = jnp.exp(s)
        p = e / jnp.sum(e, axis=-1, keepdims=True)          # softmax
        oh = jnp.einsum('bqk,bkd->bqd', p, vh,
                        preferred_element_type=jnp.float32)  # (B, T, HS)
        proj = proj + jnp.dot(oh.reshape(B * T, HS),
                              wp[h * HS:(h + 1) * HS, :],
                              preferred_element_type=jnp.float32)

    x1 = x + proj + bp_ref[...]                              # residual 1

    # ---------------- LayerNorm 2 + feed-forward ----------------------------
    h2 = _layernorm(x1, g2_ref[...], b2_ref[...])
    f = jnp.dot(h2, w1_ref[...], preferred_element_type=jnp.float32) + b1f_ref[...]
    f = jnp.maximum(f, 0.0)                                  # ReLU
    f = jnp.dot(f, w2_ref[...], preferred_element_type=jnp.float32) + b2f_ref[...]

    o_ref[...] = (x1 + f).reshape(B, T, C).astype(o_ref.dtype)


@jax.jit
def block_forward(x, params):
    """Wrapper: repack PyTorch-layout params, then one pallas_call (no grid)."""
    B, T, C = x.shape
    H, HS = N_HEADS, C // N_HEADS

    # nn.Linear stores weight as (out, in); per-head q/k/v are (H, HS, C).
    # Stack them into one (C, 3*C) operand so qkv is a single MXU matmul.
    def cols(w):                                 # (H, HS, C) -> (C, H*HS)
        return jnp.transpose(w, (2, 0, 1)).reshape(C, H * HS)

    wqkv = jnp.concatenate(
        [cols(params['wq']), cols(params['wk']), cols(params['wv'])], axis=1)
    bqkv = jnp.concatenate(
        [params['bq'].reshape(-1), params['bk'].reshape(-1),
         params['bv'].reshape(-1)])[None, :]

    row = lambda a: a[None, :]                   # biases / LN params as (1, N)
    args = (
        x,
        row(params['ln1_g']), row(params['ln1_b']),
        wqkv, bqkv,
        params['wp'].T, row(params['bp']),
        row(params['ln2_g']), row(params['ln2_b']),
        params['w1'].T, row(params['b1']),
        params['w2'].T, row(params['b2']),
    )

    # No grid: the whole problem (< 100 KB resident) runs in one invocation;
    # default BlockSpecs map every operand fully into VMEM (no double-buffered
    # weight copies, no per-step pipeline overhead).
    return pl.pallas_call(
        functools.partial(block_kernel, n_heads=N_HEADS),
        out_shape=jax.ShapeDtypeStruct((B, T, C), x.dtype),
    )(*args)


def reference_block(x, p):
    """Pure-JAX reference mirroring the PyTorch Block.forward (eval mode)."""
    B, T, C = x.shape
    H = N_HEADS

    def ln(h, g, b):
        mu = h.mean(-1, keepdims=True)
        var = ((h - mu) ** 2).mean(-1, keepdims=True)
        return (h - mu) / jnp.sqrt(var + LN_EPS) * g + b

    h1 = ln(x, p['ln1_g'], p['ln1_b'])
    mask = jnp.tril(jnp.ones((T, T), dtype=bool))
    heads = []
    for h in range(H):
        q = h1 @ p['wq'][h].T + p['bq'][h]
        k = h1 @ p['wk'][h].T + p['bk'][h]
        v = h1 @ p['wv'][h].T + p['bv'][h]
        s = (q @ jnp.swapaxes(k, -1, -2)) / (C ** 0.5)
        s = jnp.where(mask, s, -jnp.inf)
        s = jax.nn.softmax(s, axis=-1)
        heads.append(s @ v)
    attn = jnp.concatenate(heads, axis=-1) @ p['wp'].T + p['bp']
    x = x + attn
    h2 = ln(x, p['ln2_g'], p['ln2_b'])
    f = jax.nn.relu(h2 @ p['w1'].T + p['b1']) @ p['w2'].T + p['b2']
    return x + f


if __name__ == "__main__":
    B, T, C, H, HS, HID = 2, BLOCK_SIZE, N_EMBD, N_HEADS, HEAD_SIZE, N_HIDDEN

    key = jax.random.PRNGKey(0)
    ks = jax.random.split(key, 17)
    sc = 0.1

    x = jax.random.normal(ks[0], (B, T, C), dtype=jnp.float32)
    params = dict(
        # per-head q/k/v linears, nn.Linear layout: weight (out=HS, in=C)
        wq=jax.random.normal(ks[1], (H, HS, C), jnp.float32) * sc,
        bq=jax.random.normal(ks[2], (H, HS), jnp.float32) * sc,
        wk=jax.random.normal(ks[3], (H, HS, C), jnp.float32) * sc,
        bk=jax.random.normal(ks[4], (H, HS), jnp.float32) * sc,
        wv=jax.random.normal(ks[5], (H, HS, C), jnp.float32) * sc,
        bv=jax.random.normal(ks[6], (H, HS), jnp.float32) * sc,
        # output projection (C, C) + bias
        wp=jax.random.normal(ks[7], (C, C), jnp.float32) * sc,
        bp=jax.random.normal(ks[8], (C,), jnp.float32) * sc,
        # layer norms
        ln1_g=1.0 + jax.random.normal(ks[9], (C,), jnp.float32) * sc,
        ln1_b=jax.random.normal(ks[10], (C,), jnp.float32) * sc,
        ln2_g=1.0 + jax.random.normal(ks[11], (C,), jnp.float32) * sc,
        ln2_b=jax.random.normal(ks[12], (C,), jnp.float32) * sc,
        # feed-forward: Linear(C, 4C) -> ReLU -> Linear(4C, C)
        w1=jax.random.normal(ks[13], (HID, C), jnp.float32) * sc,
        b1=jax.random.normal(ks[14], (HID,), jnp.float32) * sc,
        w2=jax.random.normal(ks[15], (C, HID), jnp.float32) * sc,
        b2=jax.random.normal(ks[16], (C,), jnp.float32) * sc,
    )

    out = jax.block_until_ready(block_forward(x, params))
    ref = reference_block(x, params)

    assert out.shape == (B, T, C), out.shape
    max_err = float(jnp.max(jnp.abs(out - ref)))
    assert jnp.allclose(out, ref, atol=1e-4, rtol=1e-4), max_err

    print("KERNEL_OK")
</pallas_src>

<mosaic_0001>
module attributes {stable_mosaic.version = 11 : i64} {
  func.func @block_kernel(%arg0: memref<2x8x32xf32, #tpu.memory_space<vmem>>, %arg1: memref<1x32xf32, #tpu.memory_space<vmem>>, %arg2: memref<1x32xf32, #tpu.memory_space<vmem>>, %arg3: memref<32x96xf32, #tpu.memory_space<vmem>>, %arg4: memref<1x96xf32, #tpu.memory_space<vmem>>, %arg5: memref<32x32xf32, #tpu.memory_space<vmem>>, %arg6: memref<1x32xf32, #tpu.memory_space<vmem>>, %arg7: memref<1x32xf32, #tpu.memory_space<vmem>>, %arg8: memref<1x32xf32, #tpu.memory_space<vmem>>, %arg9: memref<32x128xf32, #tpu.memory_space<vmem>>, %arg10: memref<1x128xf32, #tpu.memory_space<vmem>>, %arg11: memref<128x32xf32, #tpu.memory_space<vmem>>, %arg12: memref<1x32xf32, #tpu.memory_space<vmem>>, %arg13: memref<2x8x32xf32, #tpu.memory_space<vmem>>) attributes {dimension_semantics = [], scalar_prefetch = 0 : i64, scratch_operands = 0 : i64, tpu.core_type = #tpu.core_type<tc>} {
    %c0 = arith.constant 0 : index
    %c0_0 = arith.constant 0 : index
    %c0_1 = arith.constant 0 : index
    %0 = vector.load %arg0[%c0, %c0_0, %c0_1] : memref<2x8x32xf32, #tpu.memory_space<vmem>>, vector<2x8x32xf32>
    %1 = vector.shape_cast %0 : vector<2x8x32xf32> to vector<16x32xf32>
    %c0_2 = arith.constant 0 : index
    %c0_3 = arith.constant 0 : index
    %2 = vector.load %arg1[%c0_2, %c0_3] : memref<1x32xf32, #tpu.memory_space<vmem>>, vector<1x32xf32>
    %c0_4 = arith.constant 0 : index
    %c0_5 = arith.constant 0 : index
    %3 = vector.load %arg2[%c0_4, %c0_5] : memref<1x32xf32, #tpu.memory_space<vmem>>, vector<1x32xf32>
    %cst = arith.constant dense<0.000000e+00> : vector<16xf32>
    %4 = vector.multi_reduction <add>, %1, %cst [1] : vector<16x32xf32> to vector<16xf32>
    %5 = vector.shape_cast %4 : vector<16xf32> to vector<16x1xf32>
    %cst_6 = arith.constant 3.200000e+01 : f32
    %6 = vector.broadcast %cst_6 : f32 to vector<16x1xf32>
    %7 = arith.divf %5, %6 : vector<16x1xf32>
    %8 = vector.broadcast %7 : vector<16x1xf32> to vector<16x32xf32>
    %9 = arith.subf %1, %8 : vector<16x32xf32>
    %10 = arith.mulf %9, %9 : vector<16x32xf32>
    %cst_7 = arith.constant dense<0.000000e+00> : vector<16xf32>
    %11 = vector.multi_reduction <add>, %10, %cst_7 [1] : vector<16x32xf32> to vector<16xf32>
    %12 = vector.shape_cast %11 : vector<16xf32> to vector<16x1xf32>
    %cst_8 = arith.constant 3.200000e+01 : f32
    %13 = vector.broadcast %cst_8 : f32 to vector<16x1xf32>
    %14 = arith.divf %12, %13 : vector<16x1xf32>
    %15 = vector.broadcast %7 : vector<16x1xf32> to vector<16x32xf32>
    %16 = arith.subf %1, %15 : vector<16x32xf32>
    %cst_9 = arith.constant 9.99999974E-6 : f32
    %17 = vector.broadcast %cst_9 : f32 to vector<16x1xf32>
    %18 = arith.addf %14, %17 : vector<16x1xf32>
    %19 = math.rsqrt %18 : vector<16x1xf32>
    %20 = vector.broadcast %19 : vector<16x1xf32> to vector<16x32xf32>
    %21 = arith.mulf %16, %20 : vector<16x32xf32>
    %22 = vector.broadcast %2 : vector<1x32xf32> to vector<16x32xf32>
    %23 = arith.mulf %21, %22 : vector<16x32xf32>
    %24 = vector.broadcast %3 : vector<1x32xf32> to vector<16x32xf32>
    %25 = arith.addf %23, %24 : vector<16x32xf32>
    %c0_10 = arith.constant 0 : index
    %c0_11 = arith.constant 0 : index
    %26 = vector.load %arg3[%c0_10, %c0_11] : memref<32x96xf32, #tpu.memory_space<vmem>>, vector<32x96xf32>
    %cst_12 = arith.constant dense<0.000000e+00> : vector<16x96xf32>
    %27 = tpu.matmul %25, %26, %cst_12 {dimension_numbers = #tpu.dot_dimension_numbers<[1], [0], [0], [1], [0, 0, 1, 1], [], []>} : vector<16x32xf32>, vector<32x96xf32>, vector<16x96xf32> -> vector<16x96xf32>
    %c0_13 = arith.constant 0 : index
    %c0_14 = arith.constant 0 : index
    %28 = vector.load %arg4[%c0_13, %c0_14] : memref<1x96xf32, #tpu.memory_space<vmem>>, vector<1x96xf32>
    %29 = vector.broadcast %28 : vector<1x96xf32> to vector<16x96xf32>
    %30 = arith.addf %27, %29 : vector<16x96xf32>
    %31 = tpu.iota {dimensions = array<i32: 0>} : vector<8x8xi32>
    %32 = tpu.iota {dimensions = array<i32: 1>} : vector<8x8xi32>
    %33 = arith.cmpi sle, %32, %31 : vector<8x8xi32>
    %cst_15 = arith.constant 0.000000e+00 : f32
    %cst_16 = arith.constant -1.000000e+30 : f32
    %34 = vector.broadcast %cst_15 : f32 to vector<8x8xf32>
    %35 = vector.broadcast %cst_16 : f32 to vector<8x8xf32>
    %36 = arith.select %33, %34, %35 : vector<8x8xi1>, vector<8x8xf32>
    %c0_17 = arith.constant 0 : index
    %c0_18 = arith.constant 0 : index
    %37 = vector.load %arg5[%c0_17, %c0_18] : memref<32x32xf32, #tpu.memory_space<vmem>>, vector<32x32xf32>
    %cst_19 = arith.constant 0.000000e+00 : f32
    %38 = vector.broadcast %cst_19 : f32 to vector<16x32xf32>
    %39 = vector.extract_strided_slice %30 {offsets = [0, 0], sizes = [16, 8], strides = [1, 1]} : vector<16x96xf32> to vector<16x8xf32>
    %40 = vector.shape_cast %39 : vector<16x8xf32> to vector<2x8x8xf32>
    %41 = vector.extract_strided_slice %30 {offsets = [0, 32], sizes = [16, 8], strides = [1, 1]} : vector<16x96xf32> to vector<16x8xf32>
    %42 = vector.shape_cast %41 : vector<16x8xf32> to vector<2x8x8xf32>
    %43 = vector.extract_strided_slice %30 {offsets = [0, 64], sizes = [16, 8], strides = [1, 1]} : vector<16x96xf32> to vector<16x8xf32>
    %44 = vector.shape_cast %43 : vector<16x8xf32> to vector<2x8x8xf32>
    "tpu.trace_start"() <{level = 10 : i32, message = "bqd,bkd->bqk"}> : () -> ()
    %cst_20 = arith.constant dense<0.000000e+00> : vector<2x8x8xf32>
    %45 = tpu.matmul %40, %42, %cst_20 {dimension_numbers = #tpu.dot_dimension_numbers<[2], [2], [1], [1], [0, 0, 0, 1, 1, 1], [0], [0]>} : vector<2x8x8xf32>, vector<2x8x8xf32>, vector<2x8x8xf32> -> vector<2x8x8xf32>
    "tpu.trace_stop"() : () -> ()
    %cst_21 = arith.constant 0.176776692 : f32
    %46 = vector.broadcast %cst_21 : f32 to vector<2x8x8xf32>
    %47 = arith.mulf %45, %46 : vector<2x8x8xf32>
    %48 = vector.shape_cast %36 : vector<8x8xf32> to vector<1x8x8xf32>
    %49 = vector.broadcast %48 : vector<1x8x8xf32> to vector<2x8x8xf32>
    %50 = arith.addf %47, %49 : vector<2x8x8xf32>
    %cst_22 = arith.constant dense<0xFF800000> : vector<2x8xf32>
    %51 = vector.multi_reduction <maximumf>, %50, %cst_22 [2] : vector<2x8x8xf32> to vector<2x8xf32>
    %52 = vector.shape_cast %51 : vector<2x8xf32> to vector<2x8x1xf32>
    %53 = vector.broadcast %52 : vector<2x8x1xf32> to vector<2x8x8xf32>
    %54 = arith.subf %50, %53 : vector<2x8x8xf32>
    %55 = math.exp %54 : vector<2x8x8xf32>
    %cst_23 = arith.constant dense<0.000000e+00> : vector<2x8xf32>
    %56 = vector.multi_reduction <add>, %55, %cst_23 [2] : vector<2x8x8xf32> to vector<2x8xf32>
    %57 = vector.shape_cast %56 : vector<2x8xf32> to vector<2x8x1xf32>
    %58 = vector.broadcast %57 : vector<2x8x1xf32> to vector<2x8x8xf32>
    %59 = arith.divf %55, %58 : vector<2x8x8xf32>
    "tpu.trace_start"() <{level = 10 : i32, message = "bqk,bkd->bqd"}> : () -> ()
    %cst_24 = arith.constant dense<0.000000e+00> : vector<2x8x8xf32>
    %60 = tpu.matmul %59, %44, %cst_24 {dimension_numbers = #tpu.dot_dimension_numbers<[2], [1], [1], [2], [0, 0, 0, 1, 1, 2], [0], [0]>} : vector<2x8x8xf32>, vector<2x8x8xf32>, vector<2x8x8xf32> -> vector<2x8x8xf32>
    "tpu.trace_stop"() : () -> ()
    %61 = vector.shape_cast %60 : vector<2x8x8xf32> to vector<16x8xf32>
    %62 = vector.extract_strided_slice %37 {offsets = [0, 0], sizes = [8, 32], strides = [1, 1]} : vector<32x32xf32> to vector<8x32xf32>
    %cst_25 = arith.constant dense<0.000000e+00> : vector<16x32xf32>
    %63 = tpu.matmul %61, %62, %cst_25 {dimension_numbers = #tpu.dot_dimension_numbers<[1], [0], [0], [1], [0, 0, 1, 1], [], []>} : vector<16x8xf32>, vector<8x32xf32>, vector<16x32xf32> -> vector<16x32xf32>
    %64 = arith.addf %38, %63 : vector<16x32xf32>
    %65 = vector.extract_strided_slice %30 {offsets = [0, 8], sizes = [16, 8], strides = [1, 1]} : vector<16x96xf32> to vector<16x8xf32>
    %66 = vector.shape_cast %65 : vector<16x8xf32> to vector<2x8x8xf32>
    %67 = vector.extract_strided_slice %30 {offsets = [0, 40], sizes = [16, 8], strides = [1, 1]} : vector<16x96xf32> to vector<16x8xf32>
    %68 = vector.shape_cast %67 : vector<16x8xf32> to vector<2x8x8xf32>
    %69 = vector.extract_strided_slice %30 {offsets = [0, 72], sizes = [16, 8], strides = [1, 1]} : vector<16x96xf32> to vector<16x8xf32>
    %70 = vector.shape_cast %69 : vector<16x8xf32> to vector<2x8x8xf32>
    "tpu.trace_start"() <{level = 10 : i32, message = "bqd,bkd->bqk"}> : () -> ()
    %cst_26 = arith.constant dense<0.000000e+00> : vector<2x8x8xf32>
    %71 = tpu.matmul %66, %68, %cst_26 {dimension_numbers = #tpu.dot_dimension_numbers<[2], [2], [1], [1], [0, 0, 0, 1, 1, 1], [0], [0]>} : vector<2x8x8xf32>, vector<2x8x8xf32>, vector<2x8x8xf32> -> vector<2x8x8xf32>
    "tpu.trace_stop"() : () -> ()
    %cst_27 = arith.constant 0.176776692 : f32
    %72 = vector.broadcast %cst_27 : f32 to vector<2x8x8xf32>
    %73 = arith.mulf %71, %72 : vector<2x8x8xf32>
    %74 = vector.shape_cast %36 : vector<8x8xf32> to vector<1x8x8xf32>
    %75 = vector.broadcast %74 : vector<1x8x8xf32> to vector<2x8x8xf32>
    %76 = arith.addf %73, %75 : vector<2x8x8xf32>
    %cst_28 = arith.constant dense<0xFF800000> : vector<2x8xf32>
    %77 = vector.multi_reduction <maximumf>, %76, %cst_28 [2] : vector<2x8x8xf32> to vector<2x8xf32>
    %78 = vector.shape_cast %77 : vector<2x8xf32> to vector<2x8x1xf32>
    %79 = vector.broadcast %78 : vector<2x8x1xf32> to vector<2x8x8xf32>
    %80 = arith.subf %76, %79 : vector<2x8x8xf32>
    %81 = math.exp %80 : vector<2x8x8xf32>
    %cst_29 = arith.constant dense<0.000000e+00> : vector<2x8xf32>
    %82 = vector.multi_reduction <add>, %81, %cst_29 [2] : vector<2x8x8xf32> to vector<2x8xf32>
    %83 = vector.shape_cast %82 : vector<2x8xf32> to vector<2x8x1xf32>
    %84 = vector.broadcast %83 : vector<2x8x1xf32> to vector<2x8x8xf32>
    %85 = arith.divf %81, %84 : vector<2x8x8xf32>
    "tpu.trace_start"() <{level = 10 : i32, message = "bqk,bkd->bqd"}> : () -> ()
    %cst_30 = arith.constant dense<0.000000e+00> : vector<2x8x8xf32>
    %86 = tpu.matmul %85, %70, %cst_30 {dimension_numbers = #tpu.dot_dimension_numbers<[2], [1], [1], [2], [0, 0, 0, 1, 1, 2], [0], [0]>} : vector<2x8x8xf32>, vector<2x8x8xf32>, vector<2x8x8xf32> -> vector<2x8x8xf32>
    "tpu.trace_stop"() : () -> ()
    %87 = vector.shape_cast %86 : vector<2x8x8xf32> to vector<16x8xf32>
    %88 = vector.extract_strided_slice %37 {offsets = [8, 0], sizes = [8, 32], strides = [1, 1]} : vector<32x32xf32> to vector<8x32xf32>
    %cst_31 = arith.constant dense<0.000000e+00> : vector<16x32xf32>
    %89 = tpu.matmul %87, %88, %cst_31 {dimension_numbers = #tpu.dot_dimension_numbers<[1], [0], [0], [1], [0, 0, 1, 1], [], []>} : vector<16x8xf32>, vector<8x32xf32>, vector<16x32xf32> -> vector<16x32xf32>
    %90 = arith.addf %64, %89 : vector<16x32xf32>
    %91 = vector.extract_strided_slice %30 {offsets = [0, 16], sizes = [16, 8], strides = [1, 1]} : vector<16x96xf32> to vector<16x8xf32>
    %92 = vector.shape_cast %91 : vector<16x8xf32> to vector<2x8x8xf32>
    %93 = vector.extract_strided_slice %30 {offsets = [0, 48], sizes = [16, 8], strides = [1, 1]} : vector<16x96xf32> to vector<16x8xf32>
    %94 = vector.shape_cast %93 : vector<16x8xf32> to vector<2x8x8xf32>
    %95 = vector.extract_strided_slice %30 {offsets = [0, 80], sizes = [16, 8], strides = [1, 1]} : vector<16x96xf32> to vector<16x8xf32>
    %96 = vector.shape_cast %95 : vector<16x8xf32> to vector<2x8x8xf32>
    "tpu.trace_start"() <{level = 10 : i32, message = "bqd,bkd->bqk"}> : () -> ()
    %cst_32 = arith.constant dense<0.000000e+00> : vector<2x8x8xf32>
    %97 = tpu.matmul %92, %94, %cst_32 {dimension_numbers = #tpu.dot_dimension_numbers<[2], [2], [1], [1], [0, 0, 0, 1, 1, 1], [0], [0]>} : vector<2x8x8xf32>, vector<2x8x8xf32>, vector<2x8x8xf32> -> vector<2x8x8xf32>
    "tpu.trace_stop"() : () -> ()
    %cst_33 = arith.constant 0.176776692 : f32
    %98 = vector.broadcast %cst_33 : f32 to vector<2x8x8xf32>
    %99 = arith.mulf %97, %98 : vector<2x8x8xf32>
    %100 = vector.shape_cast %36 : vector<8x8xf32> to vector<1x8x8xf32>
    %101 = vector.broadcast %100 : vector<1x8x8xf32> to vector<2x8x8xf32>
    %102 = arith.addf %99, %101 : vector<2x8x8xf32>
    %cst_34 = arith.constant dense<0xFF800000> : vector<2x8xf32>
    %103 = vector.multi_reduction <maximumf>, %102, %cst_34 [2] : vector<2x8x8xf32> to vector<2x8xf32>
    %104 = vector.shape_cast %103 : vector<2x8xf32> to vector<2x8x1xf32>
    %105 = vector.broadcast %104 : vector<2x8x1xf32> to vector<2x8x8xf32>
    %106 = arith.subf %102, %105 : vector<2x8x8xf32>
    %107 = math.exp %106 : vector<2x8x8xf32>
    %cst_35 = arith.constant dense<0.000000e+00> : vector<2x8xf32>
    %108 = vector.multi_reduction <add>, %107, %cst_35 [2] : vector<2x8x8xf32> to vector<2x8xf32>
    %109 = vector.shape_cast %108 : vector<2x8xf32> to vector<2x8x1xf32>
    %110 = vector.broadcast %109 : vector<2x8x1xf32> to vector<2x8x8xf32>
    %111 = arith.divf %107, %110 : vector<2x8x8xf32>
    "tpu.trace_start"() <{level = 10 : i32, message = "bqk,bkd->bqd"}> : () -> ()
    %cst_36 = arith.constant dense<0.000000e+00> : vector<2x8x8xf32>
    %112 = tpu.matmul %111, %96, %cst_36 {dimension_numbers = #tpu.dot_dimension_numbers<[2], [1], [1], [2], [0, 0, 0, 1, 1, 2], [0], [0]>} : vector<2x8x8xf32>, vector<2x8x8xf32>, vector<2x8x8xf32> -> vector<2x8x8xf32>
    "tpu.trace_stop"() : () -> ()
    %113 = vector.shape_cast %112 : vector<2x8x8xf32> to vector<16x8xf32>
    %114 = vector.extract_strided_slice %37 {offsets = [16, 0], sizes = [8, 32], strides = [1, 1]} : vector<32x32xf32> to vector<8x32xf32>
    %cst_37 = arith.constant dense<0.000000e+00> : vector<16x32xf32>
    %115 = tpu.matmul %113, %114, %cst_37 {dimension_numbers = #tpu.dot_dimension_numbers<[1], [0], [0], [1], [0, 0, 1, 1], [], []>} : vector<16x8xf32>, vector<8x32xf32>, vector<16x32xf32> -> vector<16x32xf32>
    %116 = arith.addf %90, %115 : vector<16x32xf32>
    %117 = vector.extract_strided_slice %30 {offsets = [0, 24], sizes = [16, 8], strides = [1, 1]} : vector<16x96xf32> to vector<16x8xf32>
    %118 = vector.shape_cast %117 : vector<16x8xf32> to vector<2x8x8xf32>
    %119 = vector.extract_strided_slice %30 {offsets = [0, 56], sizes = [16, 8], strides = [1, 1]} : vector<16x96xf32> to vector<16x8xf32>
    %120 = vector.shape_cast %119 : vector<16x8xf32> to vector<2x8x8xf32>
    %121 = vector.extract_strided_slice %30 {offsets = [0, 88], sizes = [16, 8], strides = [1, 1]} : vector<16x96xf32> to vector<16x8xf32>
    %122 = vector.shape_cast %121 : vector<16x8xf32> to vector<2x8x8xf32>
    "tpu.trace_start"() <{level = 10 : i32, message = "bqd,bkd->bqk"}> : () -> ()
    %cst_38 = arith.constant dense<0.000000e+00> : vector<2x8x8xf32>
    %123 = tpu.matmul %118, %120, %cst_38 {dimension_numbers = #tpu.dot_dimension_numbers<[2], [2], [1], [1], [0, 0, 0, 1, 1, 1], [0], [0]>} : vector<2x8x8xf32>, vector<2x8x8xf32>, vector<2x8x8xf32> -> vector<2x8x8xf32>
    "tpu.trace_stop"() : () -> ()
    %cst_39 = arith.constant 0.176776692 : f32
    %124 = vector.broadcast %cst_39 : f32 to vector<2x8x8xf32>
    %125 = arith.mulf %123, %124 : vector<2x8x8xf32>
    %126 = vector.shape_cast %36 : vector<8x8xf32> to vector<1x8x8xf32>
    %127 = vector.broadcast %126 : vector<1x8x8xf32> to vector<2x8x8xf32>
    %128 = arith.addf %125, %127 : vector<2x8x8xf32>
    %cst_40 = arith.constant dense<0xFF800000> : vector<2x8xf32>
    %129 = vector.multi_reduction <maximumf>, %128, %cst_40 [2] : vector<2x8x8xf32> to vector<2x8xf32>
    %130 = vector.shape_cast %129 : vector<2x8xf32> to vector<2x8x1xf32>
    %131 = vector.broadcast %130 : vector<2x8x1xf32> to vector<2x8x8xf32>
    %132 = arith.subf %128, %131 : vector<2x8x8xf32>
    %133 = math.exp %132 : vector<2x8x8xf32>
    %cst_41 = arith.constant dense<0.000000e+00> : vector<2x8xf32>
    %134 = vector.multi_reduction <add>, %133, %cst_41 [2] : vector<2x8x8xf32> to vector<2x8xf32>
    %135 = vector.shape_cast %134 : vector<2x8xf32> to vector<2x8x1xf32>
    %136 = vector.broadcast %135 : vector<2x8x1xf32> to vector<2x8x8xf32>
    %137 = arith.divf %133, %136 : vector<2x8x8xf32>
    "tpu.trace_start"() <{level = 10 : i32, message = "bqk,bkd->bqd"}> : () -> ()
    %cst_42 = arith.constant dense<0.000000e+00> : vector<2x8x8xf32>
    %138 = tpu.matmul %137, %122, %cst_42 {dimension_numbers = #tpu.dot_dimension_numbers<[2], [1], [1], [2], [0, 0, 0, 1, 1, 2], [0], [0]>} : vector<2x8x8xf32>, vector<2x8x8xf32>, vector<2x8x8xf32> -> vector<2x8x8xf32>
    "tpu.trace_stop"() : () -> ()
    %139 = vector.shape_cast %138 : vector<2x8x8xf32> to vector<16x8xf32>
    %140 = vector.extract_strided_slice %37 {offsets = [24, 0], sizes = [8, 32], strides = [1, 1]} : vector<32x32xf32> to vector<8x32xf32>
    %cst_43 = arith.constant dense<0.000000e+00> : vector<16x32xf32>
    %141 = tpu.matmul %139, %140, %cst_43 {dimension_numbers = #tpu.dot_dimension_numbers<[1], [0], [0], [1], [0, 0, 1, 1], [], []>} : vector<16x8xf32>, vector<8x32xf32>, vector<16x32xf32> -> vector<16x32xf32>
    %142 = arith.addf %116, %141 : vector<16x32xf32>
    %143 = arith.addf %1, %142 : vector<16x32xf32>
    %c0_44 = arith.constant 0 : index
    %c0_45 = arith.constant 0 : index
    %144 = vector.load %arg6[%c0_44, %c0_45] : memref<1x32xf32, #tpu.memory_space<vmem>>, vector<1x32xf32>
    %145 = vector.broadcast %144 : vector<1x32xf32> to vector<16x32xf32>
    %146 = arith.addf %143, %145 : vector<16x32xf32>
    %c0_46 = arith.constant 0 : index
    %c0_47 = arith.constant 0 : index
    %147 = vector.load %arg7[%c0_46, %c0_47] : memref<1x32xf32, #tpu.memory_space<vmem>>, vector<1x32xf32>
    %c0_48 = arith.constant 0 : index
    %c0_49 = arith.constant 0 : index
    %148 = vector.load %arg8[%c0_48, %c0_49] : memref<1x32xf32, #tpu.memory_space<vmem>>, vector<1x32xf32>
    %cst_50 = arith.constant dense<0.000000e+00> : vector<16xf32>
    %149 = vector.multi_reduction <add>, %146, %cst_50 [1] : vector<16x32xf32> to vector<16xf32>
    %150 = vector.shape_cast %149 : vector<16xf32> to vector<16x1xf32>
    %cst_51 = arith.constant 3.200000e+01 : f32
    %151 = vector.broadcast %cst_51 : f32 to vector<16x1xf32>
    %152 = arith.divf %150, %151 : vector<16x1xf32>
    %153 = vector.broadcast %152 : vector<16x1xf32> to vector<16x32xf32>
    %154 = arith.subf %146, %153 : vector<16x32xf32>
    %155 = arith.mulf %154, %154 : vector<16x32xf32>
    %cst_52 = arith.constant dense<0.000000e+00> : vector<16xf32>
    %156 = vector.multi_reduction <add>, %155, %cst_52 [1] : vector<16x32xf32> to vector<16xf32>
    %157 = vector.shape_cast %156 : vector<16xf32> to vector<16x1xf32>
    %cst_53 = arith.constant 3.200000e+01 : f32
    %158 = vector.broadcast %cst_53 : f32 to vector<16x1xf32>
    %159 = arith.divf %157, %158 : vector<16x1xf32>
    %160 = vector.broadcast %152 : vector<16x1xf32> to vector<16x32xf32>
    %161 = arith.subf %146, %160 : vector<16x32xf32>
    %cst_54 = arith.constant 9.99999974E-6 : f32
    %162 = vector.broadcast %cst_54 : f32 to vector<16x1xf32>
    %163 = arith.addf %159, %162 : vector<16x1xf32>
    %164 = math.rsqrt %163 : vector<16x1xf32>
    %165 = vector.broadcast %164 : vector<16x1xf32> to vector<16x32xf32>
    %166 = arith.mulf %161, %165 : vector<16x32xf32>
    %167 = vector.broadcast %147 : vector<1x32xf32> to vector<16x32xf32>
    %168 = arith.mulf %166, %167 : vector<16x32xf32>
    %169 = vector.broadcast %148 : vector<1x32xf32> to vector<16x32xf32>
    %170 = arith.addf %168, %169 : vector<16x32xf32>
    %c0_55 = arith.constant 0 : index
    %c0_56 = arith.constant 0 : index
    %171 = vector.load %arg9[%c0_55, %c0_56] : memref<32x128xf32, #tpu.memory_space<vmem>>, vector<32x128xf32>
    %cst_57 = arith.constant dense<0.000000e+00> : vector<16x128xf32>
    %172 = tpu.matmul %170, %171, %cst_57 {dimension_numbers = #tpu.dot_dimension_numbers<[1], [0], [0], [1], [0, 0, 1, 1], [], []>} : vector<16x32xf32>, vector<32x128xf32>, vector<16x128xf32> -> vector<16x128xf32>
    %c0_58 = arith.constant 0 : index
    %c0_59 = arith.constant 0 : index
    %173 = vector.load %arg10[%c0_58, %c0_59] : memref<1x128xf32, #tpu.memory_space<vmem>>, vector<1x128xf32>
    %174 = vector.broadcast %173 : vector<1x128xf32> to vector<16x128xf32>
    %175 = arith.addf %172, %174 : vector<16x128xf32>
    %cst_60 = arith.constant 0.000000e+00 : f32
    %176 = vector.broadcast %cst_60 : f32 to vector<16x128xf32>
    %177 = arith.maximumf %175, %176 : vector<16x128xf32>
    %c0_61 = arith.constant 0 : index
    %c0_62 = arith.constant 0 : index
    %178 = vector.load %arg11[%c0_61, %c0_62] : memref<128x32xf32, #tpu.memory_space<vmem>>, vector<128x32xf32>
    %cst_63 = arith.constant dense<0.000000e+00> : vector<16x32xf32>
    %179 = tpu.matmul %177, %178, %cst_63 {dimension_numbers = #tpu.dot_dimension_numbers<[1], [0], [0], [1], [0, 0, 1, 1], [], []>} : vector<16x128xf32>, vector<128x32xf32>, vector<16x32xf32> -> vector<16x32xf32>
    %c0_64 = arith.constant 0 : index
    %c0_65 = arith.constant 0 : index
    %180 = vector.load %arg12[%c0_64, %c0_65] : memref<1x32xf32, #tpu.memory_space<vmem>>, vector<1x32xf32>
    %181 = vector.broadcast %180 : vector<1x32xf32> to vector<16x32xf32>
    %182 = arith.addf %179, %181 : vector<16x32xf32>
    %183 = arith.addf %146, %182 : vector<16x32xf32>
    %184 = vector.shape_cast %183 : vector<16x32xf32> to vector<2x8x32xf32>
    %c0_66 = arith.constant 0 : index
    %c0_67 = arith.constant 0 : index
    %c0_68 = arith.constant 0 : index
    %185 = vector.load %arg13[%c0_66, %c0_67, %c0_68] : memref<2x8x32xf32, #tpu.memory_space<vmem>>, vector<2x8x32xf32>
    tpu.vector_store %arg13[%c0_66, %c0_67, %c0_68], %184 {strides = array<i32>} : memref<2x8x32xf32, #tpu.memory_space<vmem>>, vector<2x8x32xf32>,
    return
  }
}

</mosaic_0001>

<llo_original>
// kernel: block_forward.1
$region0: #{block_forward.1}
  #allocation0 [shape = 'u32[]', space=smem, size = 0x4, offset = 0x4, fixed_abs, tag = 'smem constant byte address 0x4 - core index']
  #allocation1 [shape = 'u32[144,128]{1,0:T(1,128)}', space=vmem, size = 0x12000, scoped, tag = 'internal scratch']
  %s0 = inlined_call_operand.vmem [shape: f32[2,8,32], index: 0, kind: input, shape index: {}]
  %s1 = inlined_call_operand.vmem [shape: f32[1,32], index: 1, kind: input, shape index: {}]
  %s2 = inlined_call_operand.vmem [shape: f32[1,32], index: 2, kind: input, shape index: {}]
  %s3 = inlined_call_operand.vmem [shape: f32[32,96], index: 3, kind: input, shape index: {}]
  %s4 = inlined_call_operand.vmem [shape: f32[1,96], index: 4, kind: input, shape index: {}]
  %s5 = inlined_call_operand.vmem [shape: f32[32,32], index: 5, kind: input, shape index: {}]
  %s6 = inlined_call_operand.vmem [shape: f32[1,32], index: 6, kind: input, shape index: {}]
  %s7 = inlined_call_operand.vmem [shape: f32[1,32], index: 7, kind: input, shape index: {}]
  %s8 = inlined_call_operand.vmem [shape: f32[1,32], index: 8, kind: input, shape index: {}]
  %s9 = inlined_call_operand.vmem [shape: f32[32,128], index: 9, kind: input, shape index: {}]
  %s10 = inlined_call_operand.vmem [shape: f32[1,128], index: 10, kind: input, shape index: {}]
  %s11 = inlined_call_operand.vmem [shape: f32[128,32], index: 11, kind: input, shape index: {}]
  %s12 = inlined_call_operand.vmem [shape: f32[1,32], index: 12, kind: input, shape index: {}]
  %s13 = inlined_call_operand.hbm [shape: f32[2,8,32], index: 13, kind: output, shape index: {}]
  %s14 = sld [smem:[#allocation0]]
  $region62: #{block_forward.1} parent=0
    _
  %s16 = ssub.s32 1, %s14
  %s17 = scalar_select 0, %s16, %s14
  $region1: #{block_forward.1} parent=0
    #allocation2 [shape = 'u8[8192]{0}', space=vmem, size = 0x2000, scoped, tag = 'output window, operand 0, single buffered']
    #allocation3 [shape = 's32[1]{0}', space=sflag, size = 0x4, scoped, tag = 'scoped memory for block_forward.1']
    %18 = vsyncpa [#allocation3], 0
    // Predicated region
    $region2: #{block_forward.1} parent=1 // pred_check
      _
    $region3: #{block_forward.1} parent=1 // pred_check_branch
      %20 = sbr.rel (0) target = $region5
    $region4: #{block_forward.1} parent=1 // pred_region
      _
    $region5: #{block_forward.1} parent=1 // pred_fallthru
      _
    // Predicated region
    $region6: #{block_forward.1} parent=1 // pred_check
      _
    $region7: #{block_forward.1} parent=1 // pred_check_branch
      %22 = sbr.rel (0) target = $region9
    $region8: #{block_forward.1} parent=1 // pred_region
      _
    $region9: #{block_forward.1} parent=1 // pred_fallthru
      _
    // Predicated region
    $region10: #{block_forward.1} parent=1 // pred_check
      _
    $region11: #{block_forward.1} parent=1 // pred_check_branch
      %24 = sbr.rel (0) target = $region13
    $region12: #{block_forward.1} parent=1 // pred_region
      _
    $region13: #{block_forward.1} parent=1 // pred_fallthru
      _
    // Predicated region
    $region14: #{block_forward.1} parent=1 // pred_check
      _
    $region15: #{block_forward.1} parent=1 // pred_check_branch
      %26 = sbr.rel (0) target = $region17
    $region16: #{block_forward.1} parent=1 // pred_region
      _
    $region17: #{block_forward.1} parent=1 // pred_fallthru
      _
    // Predicated region
    $region18: #{block_forward.1} parent=1 // pred_check
      _
    $region19: #{block_forward.1} parent=1 // pred_check_branch
      %28 = sbr.rel (0) target = $region21
    $region20: #{block_forward.1} parent=1 // pred_region
      _
    $region21: #{block_forward.1} parent=1 // pred_fallthru
      _
    // Predicated region
    $region22: #{block_forward.1} parent=1 // pred_check
      _
    $region23: #{block_forward.1} parent=1 // pred_check_branch
      %30 = sbr.rel (0) target = $region25
    $region24: #{block_forward.1} parent=1 // pred_region
      _
    $region25: #{block_forward.1} parent=1 // pred_fallthru
      _
    // Predicated region
    $region26: #{block_forward.1} parent=1 // pred_check
      _
    $region27: #{block_forward.1} parent=1 // pred_check_branch
      %32 = sbr.rel (0) target = $region29
    $region28: #{block_forward.1} parent=1 // pred_region
      _
    $region29: #{block_forward.1} parent=1 // pred_fallthru
      _
    // Predicated region
    $region30: #{block_forward.1} parent=1 // pred_check
      _
    $region31: #{block_forward.1} parent=1 // pred_check_branch
      %34 = sbr.rel (0) target = $region33
    $region32: #{block_forward.1} parent=1 // pred_region
      _
    $region33: #{block_forward.1} parent=1 // pred_fallthru
      _
    // Predicated region
    $region34: #{block_forward.1} parent=1 // pred_check
      _
    $region35: #{block_forward.1} parent=1 // pred_check_branch
      %36 = sbr.rel (0) target = $region37
    $region36: #{block_forward.1} parent=1 // pred_region
      _
    $region37: #{block_forward.1} parent=1 // pred_fallthru
      _
    // Predicated region
    $region38: #{block_forward.1} parent=1 // pred_check
      _
    $region39: #{block_forward.1} parent=1 // pred_check_branch
      %38 = sbr.rel (0) target = $region41
    $region40: #{block_forward.1} parent=1 // pred_region
      _
    $region41: #{block_forward.1} parent=1 // pred_fallthru
      _
    // Predicated region
    $region42: #{block_forward.1} parent=1 // pred_check
      _
    $region43: #{block_forward.1} parent=1 // pred_check_branch
      %40 = sbr.rel (0) target = $region45
    $region44: #{block_forward.1} parent=1 // pred_region
      _
    $region45: #{block_forward.1} parent=1 // pred_fallthru
      _
    // Predicated region
    $region46: #{block_forward.1} parent=1 // pred_check
      _
    $region47: #{block_forward.1} parent=1 // pred_check_branch
      %42 = sbr.rel (0) target = $region49
    $region48: #{block_forward.1} parent=1 // pred_region
      _
    $region49: #{block_forward.1} parent=1 // pred_fallthru
      _
    // Predicated region
    $region50: #{block_forward.1} parent=1 // pred_check
      _
    $region51: #{block_forward.1} parent=1 // pred_check_branch
      %44 = sbr.rel (0) target = $region53
    $region52: #{block_forward.1} parent=1 // pred_region
      _
    $region53: #{block_forward.1} parent=1 // pred_fallthru
      _
    %v45 = vld [vmem:[%s0] sm:$0xff]
    %v46 = vld [vmem:[%s0 + $0x8] sm:$0xff]
    %v47 = vld [vmem:[%s1] sm:$0x1]
    %v48 = vld [vmem:[%s2] sm:$0x1]
    %vm49 = vcmask 261120
    %v50 = vsel %vm49, %v45, 0.0
    %51 = vadd.xlane.f32.xlu0 %v50
    %v52 = vpop.xlane.xlu0 %51
    %v53 = vsel %vm49, %v46, 0.0
    %54 = vadd.xlane.f32.xlu0 %v53
    %v55 = vpop.xlane.xlu0 %54
    %v56 = vrcp.pop 32.0
    %v57 = vmul.f32 %v52, %v56
    %v58 = vmul.f32 %v55, %v56
    %v59 = vsub.f32 %v45, %v57
    %v60 = vsub.f32 %v46, %v58
    %v61 = vmul.f32 %v59, %v59
    %v62 = vmul.f32 %v60, %v60
    %v63 = vsel %vm49, %v61, 0.0
    %64 = vadd.xlane.f32.xlu0 %v63
    %v65 = vpop.xlane.xlu0 %64
    %v66 = vsel %vm49, %v62, 0.0
    %67 = vadd.xlane.f32.xlu0 %v66
    %v68 = vpop.xlane.xlu0 %67
    %v69 = vmul.f32 %v65, %v56
    %v70 = vmul.f32 %v68, %v56
    %v71 = vadd.f32 %v69, 1e-05
    %v72 = vadd.f32 %v70, 1e-05
    %v73 = vrsqrt.pop %v71
    %v74 = vrsqrt.pop %v72
    %v75 = vmul.f32 %v59, %v73
    %v76 = vmul.f32 %v60, %v74
    %v78 = vlaneseq
    %v79 = vshrl.u32 %v78, 7
    %v80 = vsub.s32 0, %v79
    %v81 = vrot.slane %v47, %v80
    %v83 = vmul.f32 %v75, %v81
    %v84 = vmul.f32 %v76, %v81
    %v86 = vlaneseq
    %v87 = vshrl.u32 %v86, 7
    %v88 = vsub.s32 0, %v87
    %v89 = vrot.slane %v48, %v88
    %v91 = vadd.f32 %v83, %v89
    %v92 = vadd.f32 %v84, %v89
    %v93 = vld [vmem:[%s3] sm:$0xff]
    %v94 = vld [vmem:[%s3 + $0x8] sm:$0xff]
    %v95 = vld [vmem:[%s3 + $0x10] sm:$0xff]
    %v96 = vld [vmem:[%s3 + $0x18] sm:$0xff]
    %v97 = vld [vmem:[%s4] sm:$0x1]
    %v99 = vlaneseq
    %v100 = vshrl.u32 %v99, 7
    %v101 = vsub.s32 0, %v100
    %v102 = vrot.slane %v97, %v101
    %v105 = vsel %vm49, %v91, 0
    %v108 = vsel %vm49, %v92, 0
    %110 = vmatprep.subr.mxu0 0.0
    %111 = vmatpush1.msra.mxu0 0.0
    %112 = vmatprep.subr.mxu0 0.0
    %113 = vmatpush1.msra.mxu0 0.0
    %114 = vmatprep.subr.mxu0 0.0
    %115 = vmatpush1.msra.mxu0 0.0
    %116 = vmatprep.subr.mxu0 0.0
    %117 = vmatpush1.msra.mxu0 0.0
    %118 = vmatprep.subr.mxu0 0.0
    %119 = vmatpush1.msra.mxu0 0.0
    %120 = vmatprep.subr.mxu0 0.0
    %121 = vmatpush1.msra.mxu0 0.0
    %122 = vmatprep.subr.mxu0 0.0
    %123 = vmatpush1.msra.mxu0 0.0
    %124 = vmatprep.subr.mxu0 0.0
    %125 = vmatpush1.msra.mxu0 0.0
    %126 = vmatprep.subr.mxu0 0.0
    %127 = vmatpush1.msra.mxu0 0.0
    %128 = vmatprep.subr.mxu0 0.0
    %129 = vmatpush1.msra.mxu0 0.0
    %130 = vmatprep.subr.mxu0 0.0
    %131 = vmatpush1.msra.mxu0 0.0
    %132 = vmatprep.subr.mxu0 0.0
    %133 = vmatpush1.msra.mxu0 0.0
    %134 = vmatprep.subr.mxu0 0.0
    %135 = vmatpush1.msra.mxu0 %v96
    %136 = vmatprep.subr.mxu0 0.0
    %137 = vmatpush1.msra.mxu0 %v95
    %138 = vmatprep.subr.mxu0 0.0
    %139 = vmatpush1.msra.mxu0 %v94
    %140 = vmatprep.subr.mxu0 0.0
    %141 = vmatpush1.msra.mxu0 %v93
    %142 = vmatprep.subr.mxu0 0.0
    %143 = vmatpush2.msra.mxu0 0.0
    %144 = vmatprep.subr.mxu0 0.0
    %145 = vmatpush2.msra.mxu0 0.0
    %146 = vmatprep.subr.mxu0 0.0
    %147 = vmatpush2.msra.mxu0 0.0
    %148 = vmatprep.subr.mxu0 0.0
    %149 = vmatpush2.msra.mxu0 0.0
    %150 = vmatprep.subr.mxu0 0.0
    %151 = vmatpush2.msra.mxu0 0.0
    %152 = vmatprep.subr.mxu0 0.0
    %153 = vmatpush2.msra.mxu0 0.0
    %154 = vmatprep.subr.mxu0 0.0
    %155 = vmatpush2.msra.mxu0 0.0
    %156 = vmatprep.subr.mxu0 0.0
    %157 = vmatpush2.msra.mxu0 0.0
    %158 = vmatprep.subr.mxu0 0.0
    %159 = vmatpush2.msra.mxu0 0.0
    %160 = vmatprep.subr.mxu0 0.0
    %161 = vmatpush2.msra.mxu0 0.0
    %162 = vmatprep.subr.mxu0 0.0
    %163 = vmatpush2.msra.mxu0 0.0
    %164 = vmatprep.subr.mxu0 0.0
    %165 = vmatpush2.msra.mxu0 0.0
    %166 = vmatprep.subr.mxu0 0.0
    %167 = vmatpush2.msra.mxu0 0.0
    %168 = vmatprep.subr.mxu0 0.0
    %169 = vmatpush2.msra.mxu0 0.0
    %170 = vmatprep.subr.mxu0 0.0
    %171 = vmatpush2.msra.mxu0 0.0
    %172 = vmatprep.subr.mxu0 0.0
    %173 = vmatpush2.msra.mxu0 0.0
    %174 = vmatprep.mubr.f32.mxu0 0.0
    %175 = vmatmul.mubr.f32.gmra.mxu0 %v105
    %v176 = vpop.f32.mrf.mxu0
    %v177 = vadd.f32 %v102, %v176
    %v178 = vpop.f32.mrf.mxu0
    %179 = vmatprep.mubr.f32.mxu0 0.0
    %180 = vmatmul.mubr.f32.gmra.mxu0 %v108
    %v181 = vpop.f32.mrf.mxu0
    %v182 = vadd.f32 %v102, %v181
    %v183 = vpop.f32.mrf.mxu0
    %184 = vdwg.mxu0
    %v185 = vlaneseq
    %v186 = vshrl.u32 %v185, 7
    %v187 = vlaneseq
    %v188 = vand.u32 %v187, 127
    %vm189 = vcmp.le.s32.totalorder %v188, %v186
    %v190 = vsel %vm189, 0.0, -1e+30
    %v191 = vld [vmem:[%s5] sm:$0xff]
    %v192 = vld [vmem:[%s5 + $0x8] sm:$0xff]
    %v193 = vld [vmem:[%s5 + $0x10] sm:$0xff]
    %v194 = vld [vmem:[%s5 + $0x18] sm:$0xff]
    %196 = vrot.lane.b32.xlu0 %v177, 96
    %v197 = vpop.permute.xlu0 %196
    %vm198 = vcmask 64512
    %v199 = vsel %vm198, %v177, 0
    %v201 = vsel %vm198, %v197, 0
    %203 = vmatprep.subr.mxu0 0.0
    %204 = vmatpush1.xpose.msra.mxu0 0.0
    %205 = vmatprep.subr.mxu0 0.0
    %206 = vmatpush1.xpose.msra.mxu0 0.0
    %207 = vmatprep.subr.mxu0 0.0
    %208 = vmatpush1.xpose.msra.mxu0 0.0
    %209 = vmatprep.subr.mxu0 0.0
    %210 = vmatpush1.xpose.msra.mxu0 0.0
    %211 = vmatprep.subr.mxu0 0.0
    %212 = vmatpush1.xpose.msra.mxu0 0.0
    %213 = vmatprep.subr.mxu0 0.0
    %214 = vmatpush1.xpose.msra.mxu0 0.0
    %215 = vmatprep.subr.mxu0 0.0
    %216 = vmatpush1.xpose.msra.mxu0 0.0
    %217 = vmatprep.subr.mxu0 0.0
    %218 = vmatpush1.xpose.msra.mxu0 0.0
    %219 = vmatprep.subr.mxu0 0.0
    %220 = vmatpush1.xpose.msra.mxu0 0.0
    %221 = vmatprep.subr.mxu0 0.0
    %222 = vmatpush1.xpose.msra.mxu0 0.0
    %223 = vmatprep.subr.mxu0 0.0
    %224 = vmatpush1.xpose.msra.mxu0 0.0
    %225 = vmatprep.subr.mxu0 0.0
    %226 = vmatpush1.xpose.msra.mxu0 0.0
    %227 = vmatprep.subr.mxu0 0.0
    %228 = vmatpush1.xpose.msra.mxu0 0.0
    %229 = vmatprep.subr.mxu0 0.0
    %230 = vmatpush1.xpose.msra.mxu0 0.0
    %231 = vmatprep.subr.mxu0 0.0
    %232 = vmatpush1.xpose.msra.mxu0 0.0
    %233 = vmatprep.subr.mxu0 0.0
    %234 = vmatpush1.xpose.msra.mxu0 %v201
    %235 = vmatprep.subr.mxu0 0.0
    %236 = vmatpush2.xpose.msra.mxu0 0.0
    %237 = vmatprep.subr.mxu0 0.0
    %238 = vmatpush2.xpose.msra.mxu0 0.0
    %239 = vmatprep.subr.mxu0 0.0
    %240 = vmatpush2.xpose.msra.mxu0 0.0
    %241 = vmatprep.subr.mxu0 0.0
    %242 = vmatpush2.xpose.msra.mxu0 0.0
    %243 = vmatprep.subr.mxu0 0.0
    %244 = vmatpush2.xpose.msra.mxu0 0.0
    %245 = vmatprep.subr.mxu0 0.0
    %246 = vmatpush2.xpose.msra.mxu0 0.0
    %247 = vmatprep.subr.mxu0 0.0
    %248 = vmatpush2.xpose.msra.mxu0 0.0
    %249 = vmatprep.subr.mxu0 0.0
    %250 = vmatpush2.xpose.msra.mxu0 0.0
    %251 = vmatprep.subr.mxu0 0.0
    %252 = vmatpush2.xpose.msra.mxu0 0.0
    %253 = vmatprep.subr.mxu0 0.0
    %254 = vmatpush2.xpose.msra.mxu0 0.0
    %255 = vmatprep.subr.mxu0 0.0
    %256 = vmatpush2.xpose.msra.mxu0 0.0
    %257 = vmatprep.subr.mxu0 0.0
    %258 = vmatpush2.xpose.msra.mxu0 0.0
    %259 = vmatprep.subr.mxu0 0.0
    %260 = vmatpush2.xpose.msra.mxu0 0.0
    %261 = vmatprep.subr.mxu0 0.0
    %262 = vmatpush2.xpose.msra.mxu0 0.0
    %263 = vmatprep.subr.mxu0 0.0
    %264 = vmatpush2.xpose.msra.mxu0 0.0
    %265 = vmatprep.subr.mxu0 0.0
    %266 = vmatpush2.xpose.msra.mxu0 0.0
    %267 = vmatprep.mubr.f32.mxu0 0.0
    %268 = vmatmul.mubr.f32.gmra.mxu0 %v199
    %v269 = vpop.f32.mrf.mxu0
    %v270 = vadd.f32 0.0, %v269
    %v271 = vpop.f32.mrf.mxu0
    %272 = vdwg.mxu0
    %274 = vrot.lane.b32.xlu0 %v182, 96
    %v275 = vpop.permute.xlu0 %274
    %v276 = vsel %vm198, %v182, 0
    %v278 = vsel %vm198, %v275, 0
    %280 = vmatprep.subr.mxu0 0.0
    %281 = vmatpush1.xpose.msra.mxu0 0.0
    %282 = vmatprep.subr.mxu0 0.0
    %283 = vmatpush1.xpose.msra.mxu0 0.0
    %284 = vmatprep.subr.mxu0 0.0
    %285 = vmatpush1.xpose.msra.mxu0 0.0
    %286 = vmatprep.subr.mxu0 0.0
    %287 = vmatpush1.xpose.msra.mxu0 0.0
    %288 = vmatprep.subr.mxu0 0.0
    %289 = vmatpush1.xpose.msra.mxu0 0.0
    %290 = vmatprep.subr.mxu0 0.0
    %291 = vmatpush1.xpose.msra.mxu0 0.0
    %292 = vmatprep.subr.mxu0 0.0
    %293 = vmatpush1.xpose.msra.mxu0 0.0
    %294 = vmatprep.subr.mxu0 0.0
    %295 = vmatpush1.xpose.msra.mxu0 0.0
    %296 = vmatprep.subr.mxu0 0.0
    %297 = vmatpush1.xpose.msra.mxu0 0.0
    %298 = vmatprep.subr.mxu0 0.0
    %299 = vmatpush1.xpose.msra.mxu0 0.0
    %300 = vmatprep.subr.mxu0 0.0
    %301 = vmatpush1.xpose.msra.mxu0 0.0
    %302 = vmatprep.subr.mxu0 0.0
    %303 = vmatpush1.xpose.msra.mxu0 0.0
    %304 = vmatprep.subr.mxu0 0.0
    %305 = vmatpush1.xpose.msra.mxu0 0.0
    %306 = vmatprep.subr.mxu0 0.0
    %307 = vmatpush1.xpose.msra.mxu0 0.0
    %308 = vmatprep.subr.mxu0 0.0
    %309 = vmatpush1.xpose.msra.mxu0 0.0
    %310 = vmatprep.subr.mxu0 0.0
    %311 = vmatpush1.xpose.msra.mxu0 %v278
    %312 = vmatprep.subr.mxu0 0.0
    %313 = vmatpush2.xpose.msra.mxu0 0.0
    %314 = vmatprep.subr.mxu0 0.0
    %315 = vmatpush2.xpose.msra.mxu0 0.0
    %316 = vmatprep.subr.mxu0 0.0
    %317 = vmatpush2.xpose.msra.mxu0 0.0
    %318 = vmatprep.subr.mxu0 0.0
    %319 = vmatpush2.xpose.msra.mxu0 0.0
    %320 = vmatprep.subr.mxu0 0.0
    %321 = vmatpush2.xpose.msra.mxu0 0.0
    %322 = vmatprep.subr.mxu0 0.0
    %323 = vmatpush2.xpose.msra.mxu0 0.0
    %324 = vmatprep.subr.mxu0 0.0
    %325 = vmatpush2.xpose.msra.mxu0 0.0
    %326 = vmatprep.subr.mxu0 0.0
    %327 = vmatpush2.xpose.msra.mxu0 0.0
    %328 = vmatprep.subr.mxu0 0.0
    %329 = vmatpush2.xpose.msra.mxu0 0.0
    %330 = vmatprep.subr.mxu0 0.0
    %331 = vmatpush2.xpose.msra.mxu0 0.0
    %332 = vmatprep.subr.mxu0 0.0
    %333 = vmatpush2.xpose.msra.mxu0 0.0
    %334 = vmatprep.subr.mxu0 0.0
    %335 = vmatpush2.xpose.msra.mxu0 0.0
    %336 = vmatprep.subr.mxu0 0.0
    %337 = vmatpush2.xpose.msra.mxu0 0.0
    %338 = vmatprep.subr.mxu0 0.0
    %339 = vmatpush2.xpose.msra.mxu0 0.0
    %340 = vmatprep.subr.mxu0 0.0
    %341 = vmatpush2.xpose.msra.mxu0 0.0
    %342 = vmatprep.subr.mxu0 0.0
    %343 = vmatpush2.xpose.msra.mxu0 0.0
    %344 = vmatprep.mubr.f32.mxu0 0.0
    %345 = vmatmul.mubr.f32.gmra.mxu0 %v276
    %v346 = vpop.f32.mrf.mxu0
    %v347 = vadd.f32 0.0, %v346
    %v348 = vpop.f32.mrf.mxu0
    %349 = vdwg.mxu0
    %v350 = vmul.f32 %v270, 0.17677669
    %v351 = vmul.f32 %v347, 0.17677669
    %v352 = vadd.f32 %v350, %v190
    %v353 = vadd.f32 %v351, %v190
    %v354 = vsel %vm198, %v352, -inf
    %355 = vmax.xlane.f32.xlu0 %v354
    %v356 = vpop.xlane.xlu0 %355
    %v357 = vsel %vm198, %v353, -inf
    %358 = vmax.xlane.f32.xlu0 %v357
    %v359 = vpop.xlane.xlu0 %358
    %v360 = vsub.f32 %v352, %v356
    %v361 = vsub.f32 %v353, %v359
    %v362 = vmul.f32 %v360, 1.442695
    %v363 = vpow.pop %v362
    %v364 = vmul.f32 %v361, 1.442695
    %v365 = vpow.pop %v364
    %v366 = vsel %vm198, %v363, 0.0
    %367 = vadd.xlane.f32.xlu0 %v366
    %v368 = vpop.xlane.xlu0 %367
    %v369 = vsel %vm198, %v365, 0.0
    %370 = vadd.xlane.f32.xlu0 %v369
    %v371 = vpop.xlane.xlu0 %370
    %v372 = vrcp.pop %v368
    %v373 = vmul.f32 %v363, %v372
    %v374 = vrcp.pop %v371
    %v375 = vmul.f32 %v365, %v374
    %376 = vrot.lane.b32.xlu0 %v177, 64
    %v377 = vpop.permute.xlu0 %376
    %v380 = vsel %vm198, %v373, 0
    %382 = vmatprep.subr.mxu0 0.0
    %383 = vmatpush1.msra.mxu0 0.0
    %384 = vmatprep.subr.mxu0 0.0
    %385 = vmatpush1.msra.mxu0 0.0
    %386 = vmatprep.subr.mxu0 0.0
    %387 = vmatpush1.msra.mxu0 0.0
    %388 = vmatprep.subr.mxu0 0.0
    %389 = vmatpush1.msra.mxu0 0.0
    %390 = vmatprep.subr.mxu0 0.0
    %391 = vmatpush1.msra.mxu0 0.0
    %392 = vmatprep.subr.mxu0 0.0
    %393 = vmatpush1.msra.mxu0 0.0
    %394 = vmatprep.subr.mxu0 0.0
    %395 = vmatpush1.msra.mxu0 0.0
    %396 = vmatprep.subr.mxu0 0.0
    %397 = vmatpush1.msra.mxu0 0.0
    %398 = vmatprep.subr.mxu0 0.0
    %399 = vmatpush1.msra.mxu0 0.0
    %400 = vmatprep.subr.mxu0 0.0
    %401 = vmatpush1.msra.mxu0 0.0
    %402 = vmatprep.subr.mxu0 0.0
    %403 = vmatpush1.msra.mxu0 0.0
    %404 = vmatprep.subr.mxu0 0.0
    %405 = vmatpush1.msra.mxu0 0.0
    %406 = vmatprep.subr.mxu0 0.0
    %407 = vmatpush1.msra.mxu0 0.0
    %408 = vmatprep.subr.mxu0 0.0
    %409 = vmatpush1.msra.mxu0 0.0
    %410 = vmatprep.subr.mxu0 0.0
    %411 = vmatpush1.msra.mxu0 0.0
    %412 = vmatprep.subr.mxu0 0.0
    %413 = vmatpush1.msra.mxu0 %v377
    %414 = vmatprep.subr.mxu0 0.0
    %415 = vmatpush2.msra.mxu0 0.0
    %416 = vmatprep.subr.mxu0 0.0
    %417 = vmatpush2.msra.mxu0 0.0
    %418 = vmatprep.subr.mxu0 0.0
    %419 = vmatpush2.msra.mxu0 0.0
    %420 = vmatprep.subr.mxu0 0.0
    %421 = vmatpush2.msra.mxu0 0.0
    %422 = vmatprep.subr.mxu0 0.0
    %423 = vmatpush2.msra.mxu0 0.0
    %424 = vmatprep.subr.mxu0 0.0
    %425 = vmatpush2.msra.mxu0 0.0
    %426 = vmatprep.subr.mxu0 0.0
    %427 = vmatpush2.msra.mxu0 0.0
    %428 = vmatprep.subr.mxu0 0.0
    %429 = vmatpush2.msra.mxu0 0.0
    %430 = vmatprep.subr.mxu0 0.0
    %431 = vmatpush2.msra.mxu0 0.0
    %432 = vmatprep.subr.mxu0 0.0
    %433 = vmatpush2.msra.mxu0 0.0
    %434 = vmatprep.subr.mxu0 0.0
    %435 = vmatpush2.msra.mxu0 0.0
    %436 = vmatprep.subr.mxu0 0.0
    %437 = vmatpush2.msra.mxu0 0.0
    %438 = vmatprep.subr.mxu0 0.0
    %439 = vmatpush2.msra.mxu0 0.0
    %440 = vmatprep.subr.mxu0 0.0
    %441 = vmatpush2.msra.mxu0 0.0
    %442 = vmatprep.subr.mxu0 0.0
    %443 = vmatpush2.msra.mxu0 0.0
    %444 = vmatprep.subr.mxu0 0.0
    %445 = vmatpush2.msra.mxu0 0.0
    %446 = vmatprep.mubr.f32.mxu0 0.0
    %447 = vmatmul.mubr.f32.gmra.mxu0 %v380
    %v448 = vpop.f32.mrf.mxu0
    %v449 = vadd.f32 0.0, %v448
    %v450 = vpop.f32.mrf.mxu0
    %451 = vdwg.mxu0
    %452 = vrot.lane.b32.xlu0 %v182, 64
    %v453 = vpop.permute.xlu0 %452
    %v456 = vsel %vm198, %v375, 0
    %458 = vmatprep.subr.mxu0 0.0
    %459 = vmatpush1.msra.mxu0 0.0
    %460 = vmatprep.subr.mxu0 0.0
    %461 = vmatpush1.msra.mxu0 0.0
    %462 = vmatprep.subr.mxu0 0.0
    %463 = vmatpush1.msra.mxu0 0.0
    %464 = vmatprep.subr.mxu0 0.0
    %465 = vmatpush1.msra.mxu0 0.0
    %466 = vmatprep.subr.mxu0 0.0
    %467 = vmatpush1.msra.mxu0 0.0
    %468 = vmatprep.subr.mxu0 0.0
    %469 = vmatpush1.msra.mxu0 0.0
    %470 = vmatprep.subr.mxu0 0.0
    %471 = vmatpush1.msra.mxu0 0.0
    %472 = vmatprep.subr.mxu0 0.0
    %473 = vmatpush1.msra.mxu0 0.0
    %474 = vmatprep.subr.mxu0 0.0
    %475 = vmatpush1.msra.mxu0 0.0
    %476 = vmatprep.subr.mxu0 0.0
    %477 = vmatpush1.msra.mxu0 0.0
    %478 = vmatprep.subr.mxu0 0.0
    %479 = vmatpush1.msra.mxu0 0.0
    %480 = vmatprep.subr.mxu0 0.0
    %481 = vmatpush1.msra.mxu0 0.0
    %482 = vmatprep.subr.mxu0 0.0
    %483 = vmatpush1.msra.mxu0 0.0
    %484 = vmatprep.subr.mxu0 0.0
    %485 = vmatpush1.msra.mxu0 0.0
    %486 = vmatprep.subr.mxu0 0.0
    %487 = vmatpush1.msra.mxu0 0.0
    %488 = vmatprep.subr.mxu0 0.0
    %489 = vmatpush1.msra.mxu0 %v453
    %490 = vmatprep.subr.mxu0 0.0
    %491 = vmatpush2.msra.mxu0 0.0
    %492 = vmatprep.subr.mxu0 0.0
    %493 = vmatpush2.msra.mxu0 0.0
    %494 = vmatprep.subr.mxu0 0.0
    %495 = vmatpush2.msra.mxu0 0.0
    %496 = vmatprep.subr.mxu0 0.0
    %497 = vmatpush2.msra.mxu0 0.0
    %498 = vmatprep.subr.mxu0 0.0
    %499 = vmatpush2.msra.mxu0 0.0
    %500 = vmatprep.subr.mxu0 0.0
    %501 = vmatpush2.msra.mxu0 0.0
    %502 = vmatprep.subr.mxu0 0.0
    %503 = vmatpush2.msra.mxu0 0.0
    %504 = vmatprep.subr.mxu0 0.0
    %505 = vmatpush2.msra.mxu0 0.0
    %506 = vmatprep.subr.mxu0 0.0
    %507 = vmatpush2.msra.mxu0 0.0
    %508 = vmatprep.subr.mxu0 0.0
    %509 = vmatpush2.msra.mxu0 0.0
    %510 = vmatprep.subr.mxu0 0.0
    %511 = vmatpush2.msra.mxu0 0.0
    %512 = vmatprep.subr.mxu0 0.0
    %513 = vmatpush2.msra.mxu0 0.0
    %514 = vmatprep.subr.mxu0 0.0
    %515 = vmatpush2.msra.mxu0 0.0
    %516 = vmatprep.subr.mxu0 0.0
    %517 = vmatpush2.msra.mxu0 0.0
    %518 = vmatprep.subr.mxu0 0.0
    %519 = vmatpush2.msra.mxu0 0.0
    %520 = vmatprep.subr.mxu0 0.0
    %521 = vmatpush2.msra.mxu0 0.0
    %522 = vmatprep.mubr.f32.mxu0 0.0
    %523 = vmatmul.mubr.f32.gmra.mxu0 %v456
    %v524 = vpop.f32.mrf.mxu0
    %v525 = vadd.f32 0.0, %v524
    %v526 = vpop.f32.mrf.mxu0
    %527 = vdwg.mxu0
    %528 = vrot.lane.b32.xlu0 %v177, 120
    %v529 = vpop.permute.xlu0 %528
    %530 = vrot.lane.b32.xlu0 %v177, 88
    %v531 = vpop.permute.xlu0 %530
    %v532 = vsel %vm198, %v529, 0
    %v534 = vsel %vm198, %v531, 0
    %536 = vmatprep.subr.mxu0 0.0
    %537 = vmatpush1.xpose.msra.mxu0 0.0
    %538 = vmatprep.subr.mxu0 0.0
    %539 = vmatpush1.xpose.msra.mxu0 0.0
    %540 = vmatprep.subr.mxu0 0.0
    %541 = vmatpush1.xpose.msra.mxu0 0.0
    %542 = vmatprep.subr.mxu0 0.0
    %543 = vmatpush1.xpose.msra.mxu0 0.0
    %544 = vmatprep.subr.mxu0 0.0
    %545 = vmatpush1.xpose.msra.mxu0 0.0
    %546 = vmatprep.subr.mxu0 0.0
    %547 = vmatpush1.xpose.msra.mxu0 0.0
    %548 = vmatprep.subr.mxu0 0.0
    %549 = vmatpush1.xpose.msra.mxu0 0.0
    %550 = vmatprep.subr.mxu0 0.0
    %551 = vmatpush1.xpose.msra.mxu0 0.0
    %552 = vmatprep.subr.mxu0 0.0
    %553 = vmatpush1.xpose.msra.mxu0 0.0
    %554 = vmatprep.subr.mxu0 0.0
    %555 = vmatpush1.xpose.msra.mxu0 0.0
    %556 = vmatprep.subr.mxu0 0.0
    %557 = vmatpush1.xpose.msra.mxu0 0.0
    %558 = vmatprep.subr.mxu0 0.0
    %559 = vmatpush1.xpose.msra.mxu0 0.0
    %560 = vmatprep.subr.mxu0 0.0
    %561 = vmatpush1.xpose.msra.mxu0 0.0
    %562 = vmatprep.subr.mxu0 0.0
    %563 = vmatpush1.xpose.msra.mxu0 0.0
    %564 = vmatprep.subr.mxu0 0.0
    %565 = vmatpush1.xpose.msra.mxu0 0.0
    %566 = vmatprep.subr.mxu0 0.0
    %567 = vmatpush1.xpose.msra.mxu0 %v534
    %568 = vmatprep.subr.mxu0 0.0
    %569 = vmatpush2.xpose.msra.mxu0 0.0
    %570 = vmatprep.subr.mxu0 0.0
    %571 = vmatpush2.xpose.msra.mxu0 0.0
    %572 = vmatprep.subr.mxu0 0.0
    %573 = vmatpush2.xpose.msra.mxu0 0.0
    %574 = vmatprep.subr.mxu0 0.0
    %575 = vmatpush2.xpose.msra.mxu0 0.0
    %576 = vmatprep.subr.mxu0 0.0
    %577 = vmatpush2.xpose.msra.mxu0 0.0
    %578 = vmatprep.subr.mxu0 0.0
    %579 = vmatpush2.xpose.msra.mxu0 0.0
    %580 = vmatprep.subr.mxu0 0.0
    %581 = vmatpush2.xpose.msra.mxu0 0.0
    %582 = vmatprep.subr.mxu0 0.0
    %583 = vmatpush2.xpose.msra.mxu0 0.0
    %584 = vmatprep.subr.mxu0 0.0
    %585 = vmatpush2.xpose.msra.mxu0 0.0
    %586 = vmatprep.subr.mxu0 0.0
    %587 = vmatpush2.xpose.msra.mxu0 0.0
    %588 = vmatprep.subr.mxu0 0.0
    %589 = vmatpush2.xpose.msra.mxu0 0.0
    %590 = vmatprep.subr.mxu0 0.0
    %591 = vmatpush2.xpose.msra.mxu0 0.0
    %592 = vmatprep.subr.mxu0 0.0
    %593 = vmatpush2.xpose.msra.mxu0 0.0
    %594 = vmatprep.subr.mxu0 0.0
    %595 = vmatpush2.xpose.msra.mxu0 0.0
    %596 = vmatprep.subr.mxu0 0.0
    %597 = vmatpush2.xpose.msra.mxu0 0.0
    %598 = vmatprep.subr.mxu0 0.0
    %599 = vmatpush2.xpose.msra.mxu0 0.0
    %600 = vmatprep.mubr.f32.mxu0 0.0
    %601 = vmatmul.mubr.f32.gmra.mxu0 %v532
    %v602 = vpop.f32.mrf.mxu0
    %v603 = vadd.f32 0.0, %v602
    %v604 = vpop.f32.mrf.mxu0
    %605 = vdwg.mxu0
    %606 = vrot.lane.b32.xlu0 %v182, 120
    %v607 = vpop.permute.xlu0 %606
    %608 = vrot.lane.b32.xlu0 %v182, 88
    %v609 = vpop.permute.xlu0 %608
    %v610 = vsel %vm198, %v607, 0
    %v612 = vsel %vm198, %v609, 0
    %614 = vmatprep.subr.mxu0 0.0
    %615 = vmatpush1.xpose.msra.mxu0 0.0
    %616 = vmatprep.subr.mxu0 0.0
    %617 = vmatpush1.xpose.msra.mxu0 0.0
    %618 = vmatprep.subr.mxu0 0.0
    %619 = vmatpush1.xpose.msra.mxu0 0.0
    %620 = vmatprep.subr.mxu0 0.0
    %621 = vmatpush1.xpose.msra.mxu0 0.0
    %622 = vmatprep.subr.mxu0 0.0
    %623 = vmatpush1.xpose.msra.mxu0 0.0
    %624 = vmatprep.subr.mxu0 0.0
    %625 = vmatpush1.xpose.msra.mxu0 0.0
    %626 = vmatprep.subr.mxu0 0.0
    %627 = vmatpush1.xpose.msra.mxu0 0.0
    %628 = vmatprep.subr.mxu0 0.0
    %629 = vmatpush1.xpose.msra.mxu0 0.0
    %630 = vmatprep.subr.mxu0 0.0
    %631 = vmatpush1.xpose.msra.mxu0 0.0
    %632 = vmatprep.subr.mxu0 0.0
    %633 = vmatpush1.xpose.msra.mxu0 0.0
    %634 = vmatprep.subr.mxu0 0.0
    %635 = vmatpush1.xpose.msra.mxu0 0.0
    %636 = vmatprep.subr.mxu0 0.0
    %637 = vmatpush1.xpose.msra.mxu0 0.0
    %638 = vmatprep.subr.mxu0 0.0
    %639 = vmatpush1.xpose.msra.mxu0 0.0
    %640 = vmatprep.subr.mxu0 0.0
    %641 = vmatpush1.xpose.msra.mxu0 0.0
    %642 = vmatprep.subr.mxu0 0.0
    %643 = vmatpush1.xpose.msra.mxu0 0.0
    %644 = vmatprep.subr.mxu0 0.0
    %645 = vmatpush1.xpose.msra.mxu0 %v612
    %646 = vmatprep.subr.mxu0 0.0
    %647 = vmatpush2.xpose.msra.mxu0 0.0
    %648 = vmatprep.subr.mxu0 0.0
    %649 = vmatpush2.xpose.msra.mxu0 0.0
    %650 = vmatprep.subr.mxu0 0.0
    %651 = vmatpush2.xpose.msra.mxu0 0.0
    %652 = vmatprep.subr.mxu0 0.0
    %653 = vmatpush2.xpose.msra.mxu0 0.0
    %654 = vmatprep.subr.mxu0 0.0
    %655 = vmatpush2.xpose.msra.mxu0 0.0
    %656 = vmatprep.subr.mxu0 0.0
    %657 = vmatpush2.xpose.msra.mxu0 0.0
    %658 = vmatprep.subr.mxu0 0.0
    %659 = vmatpush2.xpose.msra.mxu0 0.0
    %660 = vmatprep.subr.mxu0 0.0
    %661 = vmatpush2.xpose.msra.mxu0 0.0
    %662 = vmatprep.subr.mxu0 0.0
    %663 = vmatpush2.xpose.msra.mxu0 0.0
    %664 = vmatprep.subr.mxu0 0.0
    %665 = vmatpush2.xpose.msra.mxu0 0.0
    %666 = vmatprep.subr.mxu0 0.0
    %667 = vmatpush2.xpose.msra.mxu0 0.0
    %668 = vmatprep.subr.mxu0 0.0
    %669 = vmatpush2.xpose.msra.mxu0 0.0
    %670 = vmatprep.subr.mxu0 0.0
    %671 = vmatpush2.xpose.msra.mxu0 0.0
    %672 = vmatprep.subr.mxu0 0.0
    %673 = vmatpush2.xpose.msra.mxu0 0.0
    %674 = vmatprep.subr.mxu0 0.0
    %675 = vmatpush2.xpose.msra.mxu0 0.0
    %676 = vmatprep.subr.mxu0 0.0
    %677 = vmatpush2.xpose.msra.mxu0 0.0
    %678 = vmatprep.mubr.f32.mxu0 0.0
    %679 = vmatmul.mubr.f32.gmra.mxu0 %v610
    %v680 = vpop.f32.mrf.mxu0
    %v681 = vadd.f32 0.0, %v680
    %v682 = vpop.f32.mrf.mxu0
    %683 = vdwg.mxu0
    %v684 = vmul.f32 %v603, 0.17677669
    %v685 = vmul.f32 %v681, 0.17677669
    %v686 = vadd.f32 %v684, %v190
    %v687 = vadd.f32 %v685, %v190
    %v688 = vsel %vm198, %v686, -inf
    %689 = vmax.xlane.f32.xlu0 %v688
    %v690 = vpop.xlane.xlu0 %689
    %v691 = vsel %vm198, %v687, -inf
    %692 = vmax.xlane.f32.xlu0 %v691
    %v693 = vpop.xlane.xlu0 %692
    %v694 = vsub.f32 %v686, %v690
    %v695 = vsub.f32 %v687, %v693
    %v696 = vmul.f32 %v694, 1.442695
    %v697 = vpow.pop %v696
    %v698 = vmul.f32 %v695, 1.442695
    %v699 = vpow.pop %v698
    %v700 = vsel %vm198, %v697, 0.0
    %701 = vadd.xlane.f32.xlu0 %v700
    %v702 = vpop.xlane.xlu0 %701
    %v703 = vsel %vm198, %v699, 0.0
    %704 = vadd.xlane.f32.xlu0 %v703
    %v705 = vpop.xlane.xlu0 %704
    %v706 = vrcp.pop %v702
    %v707 = vmul.f32 %v697, %v706
    %v708 = vrcp.pop %v705
    %v709 = vmul.f32 %v699, %v708
    %710 = vrot.lane.b32.xlu0 %v177, 56
    %v711 = vpop.permute.xlu0 %710
    %v714 = vsel %vm198, %v707, 0
    %716 = vmatprep.subr.mxu0 0.0
    %717 = vmatpush1.msra.mxu0 0.0
    %718 = vmatprep.subr.mxu0 0.0
    %719 = vmatpush1.msra.mxu0 0.0
    %720 = vmatprep.subr.mxu0 0.0
    %721 = vmatpush1.msra.mxu0 0.0
    %722 = vmatprep.subr.mxu0 0.0
    %723 = vmatpush1.msra.mxu0 0.0
    %724 = vmatprep.subr.mxu0 0.0
    %725 = vmatpush1.msra.mxu0 0.0
    %726 = vmatprep.subr.mxu0 0.0
    %727 = vmatpush1.msra.mxu0 0.0
    %728 = vmatprep.subr.mxu0 0.0
    %729 = vmatpush1.msra.mxu0 0.0
    %730 = vmatprep.subr.mxu0 0.0
    %731 = vmatpush1.msra.mxu0 0.0
    %732 = vmatprep.subr.mxu0 0.0
    %733 = vmatpush1.msra.mxu0 0.0
    %734 = vmatprep.subr.mxu0 0.0
    %735 = vmatpush1.msra.mxu0 0.0
    %736 = vmatprep.subr.mxu0 0.0
    %737 = vmatpush1.msra.mxu0 0.0
    %738 = vmatprep.subr.mxu0 0.0
    %739 = vmatpush1.msra.mxu0 0.0
    %740 = vmatprep.subr.mxu0 0.0
    %741 = vmatpush1.msra.mxu0 0.0
    %742 = vmatprep.subr.mxu0 0.0
    %743 = vmatpush1.msra.mxu0 0.0
    %744 = vmatprep.subr.mxu0 0.0
    %745 = vmatpush1.msra.mxu0 0.0
    %746 = vmatprep.subr.mxu0 0.0
    %747 = vmatpush1.msra.mxu0 %v711
    %748 = vmatprep.subr.mxu0 0.0
    %749 = vmatpush2.msra.mxu0 0.0
    %750 = vmatprep.subr.mxu0 0.0
    %751 = vmatpush2.msra.mxu0 0.0
    %752 = vmatprep.subr.mxu0 0.0
    %753 = vmatpush2.msra.mxu0 0.0
    %754 = vmatprep.subr.mxu0 0.0
    %755 = vmatpush2.msra.mxu0 0.0
    %756 = vmatprep.subr.mxu0 0.0
    %757 = vmatpush2.msra.mxu0 0.0
    %758 = vmatprep.subr.mxu0 0.0
    %759 = vmatpush2.msra.mxu0 0.0
    %760 = vmatprep.subr.mxu0 0.0
    %761 = vmatpush2.msra.mxu0 0.0
    %762 = vmatprep.subr.mxu0 0.0
    %763 = vmatpush2.msra.mxu0 0.0
    %764 = vmatprep.subr.mxu0 0.0
    %765 = vmatpush2.msra.mxu0 0.0
    %766 = vmatprep.subr.mxu0 0.0
    %767 = vmatpush2.msra.mxu0 0.0
    %768 = vmatprep.subr.mxu0 0.0
    %769 = vmatpush2.msra.mxu0 0.0
    %770 = vmatprep.subr.mxu0 0.0
    %771 = vmatpush2.msra.mxu0 0.0
    %772 = vmatprep.subr.mxu0 0.0
    %773 = vmatpush2.msra.mxu0 0.0
    %774 = vmatprep.subr.mxu0 0.0
    %775 = vmatpush2.msra.mxu0 0.0
    %776 = vmatprep.subr.mxu0 0.0
    %777 = vmatpush2.msra.mxu0 0.0
    %778 = vmatprep.subr.mxu0 0.0
    %779 = vmatpush2.msra.mxu0 0.0
    %780 = vmatprep.mubr.f32.mxu0 0.0
    %781 = vmatmul.mubr.f32.gmra.mxu0 %v714
    %v782 = vpop.f32.mrf.mxu0
    %v783 = vadd.f32 0.0, %v782
    %v784 = vpop.f32.mrf.mxu0
    %785 = vdwg.mxu0
    %786 = vrot.lane.b32.xlu0 %v182, 56
    %v787 = vpop.permute.xlu0 %786
    %v790 = vsel %vm198, %v709, 0
    %792 = vmatprep.subr.mxu0 0.0
    %793 = vmatpush1.msra.mxu0 0.0
    %794 = vmatprep.subr.mxu0 0.0
    %795 = vmatpush1.msra.mxu0 0.0
    %796 = vmatprep.subr.mxu0 0.0
    %797 = vmatpush1.msra.mxu0 0.0
    %798 = vmatprep.subr.mxu0 0.0
    %799 = vmatpush1.msra.mxu0 0.0
    %800 = vmatprep.subr.mxu0 0.0
    %801 = vmatpush1.msra.mxu0 0.0
    %802 = vmatprep.subr.mxu0 0.0
    %803 = vmatpush1.msra.mxu0 0.0
    %804 = vmatprep.subr.mxu0 0.0
    %805 = vmatpush1.msra.mxu0 0.0
    %806 = vmatprep.subr.mxu0 0.0
    %807 = vmatpush1.msra.mxu0 0.0
    %808 = vmatprep.subr.mxu0 0.0
    %809 = vmatpush1.msra.mxu0 0.0
    %810 = vmatprep.subr.mxu0 0.0
    %811 = vmatpush1.msra.mxu0 0.0
    %812 = vmatprep.subr.mxu0 0.0
    %813 = vmatpush1.msra.mxu0 0.0
    %814 = vmatprep.subr.mxu0 0.0
    %815 = vmatpush1.msra.mxu0 0.0
    %816 = vmatprep.subr.mxu0 0.0
    %817 = vmatpush1.msra.mxu0 0.0
    %818 = vmatprep.subr.mxu0 0.0
    %819 = vmatpush1.msra.mxu0 0.0
    %820 = vmatprep.subr.mxu0 0.0
    %821 = vmatpush1.msra.mxu0 0.0
    %822 = vmatprep.subr.mxu0 0.0
    %823 = vmatpush1.msra.mxu0 %v787
    %824 = vmatprep.subr.mxu0 0.0
    %825 = vmatpush2.msra.mxu0 0.0
    %826 = vmatprep.subr.mxu0 0.0
    %827 = vmatpush2.msra.mxu0 0.0
    %828 = vmatprep.subr.mxu0 0.0
    %829 = vmatpush2.msra.mxu0 0.0
    %830 = vmatprep.subr.mxu0 0.0
    %831 = vmatpush2.msra.mxu0 0.0
    %832 = vmatprep.subr.mxu0 0.0
    %833 = vmatpush2.msra.mxu0 0.0
    %834 = vmatprep.subr.mxu0 0.0
    %835 = vmatpush2.msra.mxu0 0.0
    %836 = vmatprep.subr.mxu0 0.0
    %837 = vmatpush2.msra.mxu0 0.0
    %838 = vmatprep.subr.mxu0 0.0
    %839 = vmatpush2.msra.mxu0 0.0
    %840 = vmatprep.subr.mxu0 0.0
    %841 = vmatpush2.msra.mxu0 0.0
    %842 = vmatprep.subr.mxu0 0.0
    %843 = vmatpush2.msra.mxu0 0.0
    %844 = vmatprep.subr.mxu0 0.0
    %845 = vmatpush2.msra.mxu0 0.0
    %846 = vmatprep.subr.mxu0 0.0
    %847 = vmatpush2.msra.mxu0 0.0
    %848 = vmatprep.subr.mxu0 0.0
    %849 = vmatpush2.msra.mxu0 0.0
    %850 = vmatprep.subr.mxu0 0.0
    %851 = vmatpush2.msra.mxu0 0.0
    %852 = vmatprep.subr.mxu0 0.0
    %853 = vmatpush2.msra.mxu0 0.0
    %854 = vmatprep.subr.mxu0 0.0
    %855 = vmatpush2.msra.mxu0 0.0
    %856 = vmatprep.mubr.f32.mxu0 0.0
    %857 = vmatmul.mubr.f32.gmra.mxu0 %v790
    %v858 = vpop.f32.mrf.mxu0
    %v859 = vadd.f32 0.0, %v858
    %v860 = vpop.f32.mrf.mxu0
    %861 = vdwg.mxu0
    %v863 = vsel %vm198, %v783, 0
    %v866 = vsel %vm198, %v859, 0
    %868 = vmatprep.subr.mxu0 0.0
    %869 = vmatpush1.msra.mxu0 0.0
    %870 = vmatprep.subr.mxu0 0.0
    %871 = vmatpush1.msra.mxu0 0.0
    %872 = vmatprep.subr.mxu0 0.0
    %873 = vmatpush1.msra.mxu0 0.0
    %874 = vmatprep.subr.mxu0 0.0
    %875 = vmatpush1.msra.mxu0 0.0
    %876 = vmatprep.subr.mxu0 0.0
    %877 = vmatpush1.msra.mxu0 0.0
    %878 = vmatprep.subr.mxu0 0.0
    %879 = vmatpush1.msra.mxu0 0.0
    %880 = vmatprep.subr.mxu0 0.0
    %881 = vmatpush1.msra.mxu0 0.0
    %882 = vmatprep.subr.mxu0 0.0
    %883 = vmatpush1.msra.mxu0 0.0
    %884 = vmatprep.subr.mxu0 0.0
    %885 = vmatpush1.msra.mxu0 0.0
    %886 = vmatprep.subr.mxu0 0.0
    %887 = vmatpush1.msra.mxu0 0.0
    %888 = vmatprep.subr.mxu0 0.0
    %889 = vmatpush1.msra.mxu0 0.0
    %890 = vmatprep.subr.mxu0 0.0
    %891 = vmatpush1.msra.mxu0 0.0
    %892 = vmatprep.subr.mxu0 0.0
    %893 = vmatpush1.msra.mxu0 0.0
    %894 = vmatprep.subr.mxu0 0.0
    %895 = vmatpush1.msra.mxu0 0.0
    %896 = vmatprep.subr.mxu0 0.0
    %897 = vmatpush1.msra.mxu0 0.0
    %898 = vmatprep.subr.mxu0 0.0
    %899 = vmatpush1.msra.mxu0 %v192
    %900 = vmatprep.subr.mxu0 0.0
    %901 = vmatpush2.msra.mxu0 0.0
    %902 = vmatprep.subr.mxu0 0.0
    %903 = vmatpush2.msra.mxu0 0.0
    %904 = vmatprep.subr.mxu0 0.0
    %905 = vmatpush2.msra.mxu0 0.0
    %906 = vmatprep.subr.mxu0 0.0
    %907 = vmatpush2.msra.mxu0 0.0
    %908 = vmatprep.subr.mxu0 0.0
    %909 = vmatpush2.msra.mxu0 0.0
    %910 = vmatprep.subr.mxu0 0.0
    %911 = vmatpush2.msra.mxu0 0.0
    %912 = vmatprep.subr.mxu0 0.0
    %913 = vmatpush2.msra.mxu0 0.0
    %914 = vmatprep.subr.mxu0 0.0
    %915 = vmatpush2.msra.mxu0 0.0
    %916 = vmatprep.subr.mxu0 0.0
    %917 = vmatpush2.msra.mxu0 0.0
    %918 = vmatprep.subr.mxu0 0.0
    %919 = vmatpush2.msra.mxu0 0.0
    %920 = vmatprep.subr.mxu0 0.0
    %921 = vmatpush2.msra.mxu0 0.0
    %922 = vmatprep.subr.mxu0 0.0
    %923 = vmatpush2.msra.mxu0 0.0
    %924 = vmatprep.subr.mxu0 0.0
    %925 = vmatpush2.msra.mxu0 0.0
    %926 = vmatprep.subr.mxu0 0.0
    %927 = vmatpush2.msra.mxu0 0.0
    %928 = vmatprep.subr.mxu0 0.0
    %929 = vmatpush2.msra.mxu0 0.0
    %930 = vmatprep.subr.mxu0 0.0
    %931 = vmatpush2.msra.mxu0 0.0
    %932 = vmatprep.mubr.f32.mxu0 0.0
    %933 = vmatmul.mubr.f32.gmra.mxu0 %v863
    %v934 = vpop.f32.mrf.mxu0
    %v935 = vadd.f32 0.0, %v934
    %v936 = vpop.f32.mrf.mxu0
    %937 = vmatprep.mubr.f32.mxu0 0.0
    %938 = vmatmul.mubr.f32.gmra.mxu0 %v866
    %v939 = vpop.f32.mrf.mxu0
    %v940 = vadd.f32 0.0, %v939
    %v941 = vpop.f32.mrf.mxu0
    %942 = vdwg.mxu0
    %v944 = vsel %vm198, %v449, 0
    %v947 = vsel %vm198, %v525, 0
    %949 = vmatprep.subr.mxu0 0.0
    %950 = vmatpush1.msra.mxu0 0.0
    %951 = vmatprep.subr.mxu0 0.0
    %952 = vmatpush1.msra.mxu0 0.0
    %953 = vmatprep.subr.mxu0 0.0
    %954 = vmatpush1.msra.mxu0 0.0
    %955 = vmatprep.subr.mxu0 0.0
    %956 = vmatpush1.msra.mxu0 0.0
    %957 = vmatprep.subr.mxu0 0.0
    %958 = vmatpush1.msra.mxu0 0.0
    %959 = vmatprep.subr.mxu0 0.0
    %960 = vmatpush1.msra.mxu0 0.0
    %961 = vmatprep.subr.mxu0 0.0
    %962 = vmatpush1.msra.mxu0 0.0
    %963 = vmatprep.subr.mxu0 0.0
    %964 = vmatpush1.msra.mxu0 0.0
    %965 = vmatprep.subr.mxu0 0.0
    %966 = vmatpush1.msra.mxu0 0.0
    %967 = vmatprep.subr.mxu0 0.0
    %968 = vmatpush1.msra.mxu0 0.0
    %969 = vmatprep.subr.mxu0 0.0
    %970 = vmatpush1.msra.mxu0 0.0
    %971 = vmatprep.subr.mxu0 0.0
    %972 = vmatpush1.msra.mxu0 0.0
    %973 = vmatprep.subr.mxu0 0.0
    %974 = vmatpush1.msra.mxu0 0.0
    %975 = vmatprep.subr.mxu0 0.0
    %976 = vmatpush1.msra.mxu0 0.0
    %977 = vmatprep.subr.mxu0 0.0
    %978 = vmatpush1.msra.mxu0 0.0
    %979 = vmatprep.subr.mxu0 0.0
    %980 = vmatpush1.msra.mxu0 %v191
    %981 = vmatprep.subr.mxu0 0.0
    %982 = vmatpush2.msra.mxu0 0.0
    %983 = vmatprep.subr.mxu0 0.0
    %984 = vmatpush2.msra.mxu0 0.0
    %985 = vmatprep.subr.mxu0 0.0
    %986 = vmatpush2.msra.mxu0 0.0
    %987 = vmatprep.subr.mxu0 0.0
    %988 = vmatpush2.msra.mxu0 0.0
    %989 = vmatprep.subr.mxu0 0.0
    %990 = vmatpush2.msra.mxu0 0.0
    %991 = vmatprep.subr.mxu0 0.0
    %992 = vmatpush2.msra.mxu0 0.0
    %993 = vmatprep.subr.mxu0 0.0
    %994 = vmatpush2.msra.mxu0 0.0
    %995 = vmatprep.subr.mxu0 0.0
    %996 = vmatpush2.msra.mxu0 0.0
    %997 = vmatprep.subr.mxu0 0.0
    %998 = vmatpush2.msra.mxu0 0.0
    %999 = vmatprep.subr.mxu0 0.0
    %1000 = vmatpush2.msra.mxu0 0.0
    %1001 = vmatprep.subr.mxu0 0.0
    %1002 = vmatpush2.msra.mxu0 0.0
    %1003 = vmatprep.subr.mxu0 0.0
    %1004 = vmatpush2.msra.mxu0 0.0
    %1005 = vmatprep.subr.mxu0 0.0
    %1006 = vmatpush2.msra.mxu0 0.0
    %1007 = vmatprep.subr.mxu0 0.0
    %1008 = vmatpush2.msra.mxu0 0.0
    %1009 = vmatprep.subr.mxu0 0.0
    %1010 = vmatpush2.msra.mxu0 0.0
    %1011 = vmatprep.subr.mxu0 0.0
    %1012 = vmatpush2.msra.mxu0 0.0
    %1013 = vmatprep.mubr.f32.mxu0 0.0
    %1014 = vmatmul.mubr.f32.gmra.mxu0 %v944
    %v1015 = vpop.f32.mrf.mxu0
    %v1016 = vadd.f32 %v935, %v1015
    %v1017 = vpop.f32.mrf.mxu0
    %1018 = vmatprep.mubr.f32.mxu0 0.0
    %1019 = vmatmul.mubr.f32.gmra.mxu0 %v947
    %v1020 = vpop.f32.mrf.mxu0
    %v1021 = vadd.f32 %v940, %v1020
    %v1022 = vpop.f32.mrf.mxu0
    %1023 = vdwg.mxu0
    %1024 = vrot.lane.b32.xlu0 %v177, 112
    %v1025 = vpop.permute.xlu0 %1024
    %1026 = vrot.lane.b32.xlu0 %v177, 80
    %v1027 = vpop.permute.xlu0 %1026
    %v1028 = vsel %vm198, %v1025, 0
    %v1030 = vsel %vm198, %v1027, 0
    %1032 = vmatprep.subr.mxu0 0.0
    %1033 = vmatpush1.xpose.msra.mxu0 0.0
    %1034 = vmatprep.subr.mxu0 0.0
    %1035 = vmatpush1.xpose.msra.mxu0 0.0
    %1036 = vmatprep.subr.mxu0 0.0
    %1037 = vmatpush1.xpose.msra.mxu0 0.0
    %1038 = vmatprep.subr.mxu0 0.0
    %1039 = vmatpush1.xpose.msra.mxu0 0.0
    %1040 = vmatprep.subr.mxu0 0.0
    %1041 = vmatpush1.xpose.msra.mxu0 0.0
    %1042 = vmatprep.subr.mxu0 0.0
    %1043 = vmatpush1.xpose.msra.mxu0 0.0
    %1044 = vmatprep.subr.mxu0 0.0
    %1045 = vmatpush1.xpose.msra.mxu0 0.0
    %1046 = vmatprep.subr.mxu0 0.0
    %1047 = vmatpush1.xpose.msra.mxu0 0.0
    %1048 = vmatprep.subr.mxu0 0.0
    %1049 = vmatpush1.xpose.msra.mxu0 0.0
    %1050 = vmatprep.subr.mxu0 0.0
    %1051 = vmatpush1.xpose.msra.mxu0 0.0
    %1052 = vmatprep.subr.mxu0 0.0
    %1053 = vmatpush1.xpose.msra.mxu0 0.0
    %1054 = vmatprep.subr.mxu0 0.0
    %1055 = vmatpush1.xpose.msra.mxu0 0.0
    %1056 = vmatprep.subr.mxu0 0.0
    %1057 = vmatpush1.xpose.msra.mxu0 0.0
    %1058 = vmatprep.subr.mxu0 0.0
    %1059 = vmatpush1.xpose.msra.mxu0 0.0
    %1060 = vmatprep.subr.mxu0 0.0
    %1061 = vmatpush1.xpose.msra.mxu0 0.0
    %1062 = vmatprep.subr.mxu0 0.0
    %1063 = vmatpush1.xpose.msra.mxu0 %v1030
    %1064 = vmatprep.subr.mxu0 0.0
    %1065 = vmatpush2.xpose.msra.mxu0 0.0
    %1066 = vmatprep.subr.mxu0 0.0
    %1067 = vmatpush2.xpose.msra.mxu0 0.0
    %1068 = vmatprep.subr.mxu0 0.0
    %1069 = vmatpush2.xpose.msra.mxu0 0.0
    %1070 = vmatprep.subr.mxu0 0.0
    %1071 = vmatpush2.xpose.msra.mxu0 0.0
    %1072 = vmatprep.subr.mxu0 0.0
    %1073 = vmatpush2.xpose.msra.mxu0 0.0
    %1074 = vmatprep.subr.mxu0 0.0
    %1075 = vmatpush2.xpose.msra.mxu0 0.0
    %1076 = vmatprep.subr.mxu0 0.0
    %1077 = vmatpush2.xpose.msra.mxu0 0.0
    %1078 = vmatprep.subr.mxu0 0.0
    %1079 = vmatpush2.xpose.msra.mxu0 0.0
    %1080 = vmatprep.subr.mxu0 0.0
    %1081 = vmatpush2.xpose.msra.mxu0 0.0
    %1082 = vmatprep.subr.mxu0 0.0
    %1083 = vmatpush2.xpose.msra.mxu0 0.0
    %1084 = vmatprep.subr.mxu0 0.0
    %1085 = vmatpush2.xpose.msra.mxu0 0.0
    %1086 = vmatprep.subr.mxu0 0.0
    %1087 = vmatpush2.xpose.msra.mxu0 0.0
    %1088 = vmatprep.subr.mxu0 0.0
    %1089 = vmatpush2.xpose.msra.mxu0 0.0
    %1090 = vmatprep.subr.mxu0 0.0
    %1091 = vmatpush2.xpose.msra.mxu0 0.0
    %1092 = vmatprep.subr.mxu0 0.0
    %1093 = vmatpush2.xpose.msra.mxu0 0.0
    %1094 = vmatprep.subr.mxu0 0.0
    %1095 = vmatpush2.xpose.msra.mxu0 0.0
    %1096 = vmatprep.mubr.f32.mxu0 0.0
    %1097 = vmatmul.mubr.f32.gmra.mxu0 %v1028
    %v1098 = vpop.f32.mrf.mxu0
    %v1099 = vadd.f32 0.0, %v1098
    %v1100 = vpop.f32.mrf.mxu0
    %1101 = vdwg.mxu0
    %1102 = vrot.lane.b32.xlu0 %v182, 112
    %v1103 = vpop.permute.xlu0 %1102
    %1104 = vrot.lane.b32.xlu0 %v182, 80
    %v1105 = vpop.permute.xlu0 %1104
    %v1106 = vsel %vm198, %v1103, 0
    %v1108 = vsel %vm198, %v1105, 0
    %1110 = vmatprep.subr.mxu0 0.0
    %1111 = vmatpush1.xpose.msra.mxu0 0.0
    %1112 = vmatprep.subr.mxu0 0.0
    %1113 = vmatpush1.xpose.msra.mxu0 0.0
    %1114 = vmatprep.subr.mxu0 0.0
    %1115 = vmatpush1.xpose.msra.mxu0 0.0
    %1116 = vmatprep.subr.mxu0 0.0
    %1117 = vmatpush1.xpose.msra.mxu0 0.0
    %1118 = vmatprep.subr.mxu0 0.0
    %1119 = vmatpush1.xpose.msra.mxu0 0.0
    %1120 = vmatprep.subr.mxu0 0.0
    %1121 = vmatpush1.xpose.msra.mxu0 0.0
    %1122 = vmatprep.subr.mxu0 0.0
    %1123 = vmatpush1.xpose.msra.mxu0 0.0
    %1124 = vmatprep.subr.mxu0 0.0
    %1125 = vmatpush1.xpose.msra.mxu0 0.0
    %1126 = vmatprep.subr.mxu0 0.0
    %1127 = vmatpush1.xpose.msra.mxu0 0.0
    %1128 = vmatprep.subr.mxu0 0.0
    %1129 = vmatpush1.xpose.msra.mxu0 0.0
    %1130 = vmatprep.subr.mxu0 0.0
    %1131 = vmatpush1.xpose.msra.mxu0 0.0
    %1132 = vmatprep.subr.mxu0 0.0
    %1133 = vmatpush1.xpose.msra.mxu0 0.0
    %1134 = vmatprep.subr.mxu0 0.0
    %1135 = vmatpush1.xpose.msra.mxu0 0.0
    %1136 = vmatprep.subr.mxu0 0.0
    %1137 = vmatpush1.xpose.msra.mxu0 0.0
    %1138 = vmatprep.subr.mxu0 0.0
    %1139 = vmatpush1.xpose.msra.mxu0 0.0
    %1140 = vmatprep.subr.mxu0 0.0
    %1141 = vmatpush1.xpose.msra.mxu0 %v1108
    %1142 = vmatprep.subr.mxu0 0.0
    %1143 = vmatpush2.xpose.msra.mxu0 0.0
    %1144 = vmatprep.subr.mxu0 0.0
    %1145 = vmatpush2.xpose.msra.mxu0 0.0
    %1146 = vmatprep.subr.mxu0 0.0
    %1147 = vmatpush2.xpose.msra.mxu0 0.0
    %1148 = vmatprep.subr.mxu0 0.0
    %1149 = vmatpush2.xpose.msra.mxu0 0.0
    %1150 = vmatprep.subr.mxu0 0.0
    %1151 = vmatpush2.xpose.msra.mxu0 0.0
    %1152 = vmatprep.subr.mxu0 0.0
    %1153 = vmatpush2.xpose.msra.mxu0 0.0
    %1154 = vmatprep.subr.mxu0 0.0
    %1155 = vmatpush2.xpose.msra.mxu0 0.0
    %1156 = vmatprep.subr.mxu0 0.0
    %1157 = vmatpush2.xpose.msra.mxu0 0.0
    %1158 = vmatprep.subr.mxu0 0.0
    %1159 = vmatpush2.xpose.msra.mxu0 0.0
    %1160 = vmatprep.subr.mxu0 0.0
    %1161 = vmatpush2.xpose.msra.mxu0 0.0
    %1162 = vmatprep.subr.mxu0 0.0
    %1163 = vmatpush2.xpose.msra.mxu0 0.0
    %1164 = vmatprep.subr.mxu0 0.0
    %1165 = vmatpush2.xpose.msra.mxu0 0.0
    %1166 = vmatprep.subr.mxu0 0.0
    %1167 = vmatpush2.xpose.msra.mxu0 0.0
    %1168 = vmatprep.subr.mxu0 0.0
    %1169 = vmatpush2.xpose.msra.mxu0 0.0
    %1170 = vmatprep.subr.mxu0 0.0
    %1171 = vmatpush2.xpose.msra.mxu0 0.0
    %1172 = vmatprep.subr.mxu0 0.0
    %1173 = vmatpush2.xpose.msra.mxu0 0.0
    %1174 = vmatprep.mubr.f32.mxu0 0.0
    %1175 = vmatmul.mubr.f32.gmra.mxu0 %v1106
    %v1176 = vpop.f32.mrf.mxu0
    %v1177 = vadd.f32 0.0, %v1176
    %v1178 = vpop.f32.mrf.mxu0
    %1179 = vdwg.mxu0
    %v1180 = vmul.f32 %v1099, 0.17677669
    %v1181 = vmul.f32 %v1177, 0.17677669
    %v1182 = vadd.f32 %v1180, %v190
    %v1183 = vadd.f32 %v1181, %v190
    %v1184 = vsel %vm198, %v1182, -inf
    %1185 = vmax.xlane.f32.xlu0 %v1184
    %v1186 = vpop.xlane.xlu0 %1185
    %v1187 = vsel %vm198, %v1183, -inf
    %1188 = vmax.xlane.f32.xlu0 %v1187
    %v1189 = vpop.xlane.xlu0 %1188
    %v1190 = vsub.f32 %v1182, %v1186
    %v1191 = vsub.f32 %v1183, %v1189
    %v1192 = vmul.f32 %v1190, 1.442695
    %v1193 = vpow.pop %v1192
    %v1194 = vmul.f32 %v1191, 1.442695
    %v1195 = vpow.pop %v1194
    %v1196 = vsel %vm198, %v1193, 0.0
    %1197 = vadd.xlane.f32.xlu0 %v1196
    %v1198 = vpop.xlane.xlu0 %1197
    %v1199 = vsel %vm198, %v1195, 0.0
    %1200 = vadd.xlane.f32.xlu0 %v1199
    %v1201 = vpop.xlane.xlu0 %1200
    %v1202 = vrcp.pop %v1198
    %v1203 = vmul.f32 %v1193, %v1202
    %v1204 = vrcp.pop %v1201
    %v1205 = vmul.f32 %v1195, %v1204
    %1206 = vrot.lane.b32.xlu0 %v177, 48
    %v1207 = vpop.permute.xlu0 %1206
    %v1210 = vsel %vm198, %v1203, 0
    %1212 = vmatprep.subr.mxu0 0.0
    %1213 = vmatpush1.msra.mxu0 0.0
    %1214 = vmatprep.subr.mxu0 0.0
    %1215 = vmatpush1.msra.mxu0 0.0
    %1216 = vmatprep.subr.mxu0 0.0
    %1217 = vmatpush1.msra.mxu0 0.0
    %1218 = vmatprep.subr.mxu0 0.0
    %1219 = vmatpush1.msra.mxu0 0.0
    %1220 = vmatprep.subr.mxu0 0.0
    %1221 = vmatpush1.msra.mxu0 0.0
    %1222 = vmatprep.subr.mxu0 0.0
    %1223 = vmatpush1.msra.mxu0 0.0
    %1224 = vmatprep.subr.mxu0 0.0
    %1225 = vmatpush1.msra.mxu0 0.0
    %1226 = vmatprep.subr.mxu0 0.0
    %1227 = vmatpush1.msra.mxu0 0.0
    %1228 = vmatprep.subr.mxu0 0.0
    %1229 = vmatpush1.msra.mxu0 0.0
    %1230 = vmatprep.subr.mxu0 0.0
    %1231 = vmatpush1.msra.mxu0 0.0
    %1232 = vmatprep.subr.mxu0 0.0
    %1233 = vmatpush1.msra.mxu0 0.0
    %1234 = vmatprep.subr.mxu0 0.0
    %1235 = vmatpush1.msra.mxu0 0.0
    %1236 = vmatprep.subr.mxu0 0.0
    %1237 = vmatpush1.msra.mxu0 0.0
    %1238 = vmatprep.subr.mxu0 0.0
    %1239 = vmatpush1.msra.mxu0 0.0
    %1240 = vmatprep.subr.mxu0 0.0
    %1241 = vmatpush1.msra.mxu0 0.0
    %1242 = vmatprep.subr.mxu0 0.0
    %1243 = vmatpush1.msra.mxu0 %v1207
    %1244 = vmatprep.subr.mxu0 0.0
    %1245 = vmatpush2.msra.mxu0 0.0
    %1246 = vmatprep.subr.mxu0 0.0
    %1247 = vmatpush2.msra.mxu0 0.0
    %1248 = vmatprep.subr.mxu0 0.0
    %1249 = vmatpush2.msra.mxu0 0.0
    %1250 = vmatprep.subr.mxu0 0.0
    %1251 = vmatpush2.msra.mxu0 0.0
    %1252 = vmatprep.subr.mxu0 0.0
    %1253 = vmatpush2.msra.mxu0 0.0
    %1254 = vmatprep.subr.mxu0 0.0
    %1255 = vmatpush2.msra.mxu0 0.0
    %1256 = vmatprep.subr.mxu0 0.0
    %1257 = vmatpush2.msra.mxu0 0.0
    %1258 = vmatprep.subr.mxu0 0.0
    %1259 = vmatpush2.msra.mxu0 0.0
    %1260 = vmatprep.subr.mxu0 0.0
    %1261 = vmatpush2.msra.mxu0 0.0
    %1262 = vmatprep.subr.mxu0 0.0
    %1263 = vmatpush2.msra.mxu0 0.0
    %1264 = vmatprep.subr.mxu0 0.0
    %1265 = vmatpush2.msra.mxu0 0.0
    %1266 = vmatprep.subr.mxu0 0.0
    %1267 = vmatpush2.msra.mxu0 0.0
    %1268 = vmatprep.subr.mxu0 0.0
    %1269 = vmatpush2.msra.mxu0 0.0
    %1270 = vmatprep.subr.mxu0 0.0
    %1271 = vmatpush2.msra.mxu0 0.0
    %1272 = vmatprep.subr.mxu0 0.0
    %1273 = vmatpush2.msra.mxu0 0.0
    %1274 = vmatprep.subr.mxu0 0.0
    %1275 = vmatpush2.msra.mxu0 0.0
    %1276 = vmatprep.mubr.f32.mxu0 0.0
    %1277 = vmatmul.mubr.f32.gmra.mxu0 %v1210
    %v1278 = vpop.f32.mrf.mxu0
    %v1279 = vadd.f32 0.0, %v1278
    %v1280 = vpop.f32.mrf.mxu0
    %1281 = vdwg.mxu0
    %1282 = vrot.lane.b32.xlu0 %v182, 48
    %v1283 = vpop.permute.xlu0 %1282
    %v1286 = vsel %vm198, %v1205, 0
    %1288 = vmatprep.subr.mxu0 0.0
    %1289 = vmatpush1.msra.mxu0 0.0
    %1290 = vmatprep.subr.mxu0 0.0
    %1291 = vmatpush1.msra.mxu0 0.0
    %1292 = vmatprep.subr.mxu0 0.0
    %1293 = vmatpush1.msra.mxu0 0.0
    %1294 = vmatprep.subr.mxu0 0.0
    %1295 = vmatpush1.msra.mxu0 0.0
    %1296 = vmatprep.subr.mxu0 0.0
    %1297 = vmatpush1.msra.mxu0 0.0
    %1298 = vmatprep.subr.mxu0 0.0
    %1299 = vmatpush1.msra.mxu0 0.0
    %1300 = vmatprep.subr.mxu0 0.0
    %1301 = vmatpush1.msra.mxu0 0.0
    %1302 = vmatprep.subr.mxu0 0.0
    %1303 = vmatpush1.msra.mxu0 0.0
    %1304 = vmatprep.subr.mxu0 0.0
    %1305 = vmatpush1.msra.mxu0 0.0
    %1306 = vmatprep.subr.mxu0 0.0
    %1307 = vmatpush1.msra.mxu0 0.0
    %1308 = vmatprep.subr.mxu0 0.0
    %1309 = vmatpush1.msra.mxu0 0.0
    %1310 = vmatprep.subr.mxu0 0.0
    %1311 = vmatpush1.msra.mxu0 0.0
    %1312 = vmatprep.subr.mxu0 0.0
    %1313 = vmatpush1.msra.mxu0 0.0
    %1314 = vmatprep.subr.mxu0 0.0
    %1315 = vmatpush1.msra.mxu0 0.0
    %1316 = vmatprep.subr.mxu0 0.0
    %1317 = vmatpush1.msra.mxu0 0.0
    %1318 = vmatprep.subr.mxu0 0.0
    %1319 = vmatpush1.msra.mxu0 %v1283
    %1320 = vmatprep.subr.mxu0 0.0
    %1321 = vmatpush2.msra.mxu0 0.0
    %1322 = vmatprep.subr.mxu0 0.0
    %1323 = vmatpush2.msra.mxu0 0.0
    %1324 = vmatprep.subr.mxu0 0.0
    %1325 = vmatpush2.msra.mxu0 0.0
    %1326 = vmatprep.subr.mxu0 0.0
    %1327 = vmatpush2.msra.mxu0 0.0
    %1328 = vmatprep.subr.mxu0 0.0
    %1329 = vmatpush2.msra.mxu0 0.0
    %1330 = vmatprep.subr.mxu0 0.0
    %1331 = vmatpush2.msra.mxu0 0.0
    %1332 = vmatprep.subr.mxu0 0.0
    %1333 = vmatpush2.msra.mxu0 0.0
    %1334 = vmatprep.subr.mxu0 0.0
    %1335 = vmatpush2.msra.mxu0 0.0
    %1336 = vmatprep.subr.mxu0 0.0
    %1337 = vmatpush2.msra.mxu0 0.0
    %1338 = vmatprep.subr.mxu0 0.0
    %1339 = vmatpush2.msra.mxu0 0.0
    %1340 = vmatprep.subr.mxu0 0.0
    %1341 = vmatpush2.msra.mxu0 0.0
    %1342 = vmatprep.subr.mxu0 0.0
    %1343 = vmatpush2.msra.mxu0 0.0
    %1344 = vmatprep.subr.mxu0 0.0
    %1345 = vmatpush2.msra.mxu0 0.0
    %1346 = vmatprep.subr.mxu0 0.0
    %1347 = vmatpush2.msra.mxu0 0.0
    %1348 = vmatprep.subr.mxu0 0.0
    %1349 = vmatpush2.msra.mxu0 0.0
    %1350 = vmatprep.subr.mxu0 0.0
    %1351 = vmatpush2.msra.mxu0 0.0
    %1352 = vmatprep.mubr.f32.mxu0 0.0
    %1353 = vmatmul.mubr.f32.gmra.mxu0 %v1286
    %v1354 = vpop.f32.mrf.mxu0
    %v1355 = vadd.f32 0.0, %v1354
    %v1356 = vpop.f32.mrf.mxu0
    %1357 = vdwg.mxu0
    %v1359 = vsel %vm198, %v1279, 0
    %v1362 = vsel %vm198, %v1355, 0
    %1364 = vmatprep.subr.mxu0 0.0
    %1365 = vmatpush1.msra.mxu0 0.0
    %1366 = vmatprep.subr.mxu0 0.0
    %1367 = vmatpush1.msra.mxu0 0.0
    %1368 = vmatprep.subr.mxu0 0.0
    %1369 = vmatpush1.msra.mxu0 0.0
    %1370 = vmatprep.subr.mxu0 0.0
    %1371 = vmatpush1.msra.mxu0 0.0
    %1372 = vmatprep.subr.mxu0 0.0
    %1373 = vmatpush1.msra.mxu0 0.0
    %1374 = vmatprep.subr.mxu0 0.0
    %1375 = vmatpush1.msra.mxu0 0.0
    %1376 = vmatprep.subr.mxu0 0.0
    %1377 = vmatpush1.msra.mxu0 0.0
    %1378 = vmatprep.subr.mxu0 0.0
    %1379 = vmatpush1.msra.mxu0 0.0
    %1380 = vmatprep.subr.mxu0 0.0
    %1381 = vmatpush1.msra.mxu0 0.0
    %1382 = vmatprep.subr.mxu0 0.0
    %1383 = vmatpush1.msra.mxu0 0.0
    %1384 = vmatprep.subr.mxu0 0.0
    %1385 = vmatpush1.msra.mxu0 0.0
    %1386 = vmatprep.subr.mxu0 0.0
    %1387 = vmatpush1.msra.mxu0 0.0
    %1388 = vmatprep.subr.mxu0 0.0
    %1389 = vmatpush1.msra.mxu0 0.0
    %1390 = vmatprep.subr.mxu0 0.0
    %1391 = vmatpush1.msra.mxu0 0.0
    %1392 = vmatprep.subr.mxu0 0.0
    %1393 = vmatpush1.msra.mxu0 0.0
    %1394 = vmatprep.subr.mxu0 0.0
    %1395 = vmatpush1.msra.mxu0 %v193
    %1396 = vmatprep.subr.mxu0 0.0
    %1397 = vmatpush2.msra.mxu0 0.0
    %1398 = vmatprep.subr.mxu0 0.0
    %1399 = vmatpush2.msra.mxu0 0.0
    %1400 = vmatprep.subr.mxu0 0.0
    %1401 = vmatpush2.msra.mxu0 0.0
    %1402 = vmatprep.subr.mxu0 0.0
    %1403 = vmatpush2.msra.mxu0 0.0
    %1404 = vmatprep.subr.mxu0 0.0
    %1405 = vmatpush2.msra.mxu0 0.0
    %1406 = vmatprep.subr.mxu0 0.0
    %1407 = vmatpush2.msra.mxu0 0.0
    %1408 = vmatprep.subr.mxu0 0.0
    %1409 = vmatpush2.msra.mxu0 0.0
    %1410 = vmatprep.subr.mxu0 0.0
    %1411 = vmatpush2.msra.mxu0 0.0
    %1412 = vmatprep.subr.mxu0 0.0
    %1413 = vmatpush2.msra.mxu0 0.0
    %1414 = vmatprep.subr.mxu0 0.0
    %1415 = vmatpush2.msra.mxu0 0.0
    %1416 = vmatprep.subr.mxu0 0.0
    %1417 = vmatpush2.msra.mxu0 0.0
    %1418 = vmatprep.subr.mxu0 0.0
    %1419 = vmatpush2.msra.mxu0 0.0
    %1420 = vmatprep.subr.mxu0 0.0
    %1421 = vmatpush2.msra.mxu0 0.0
    %1422 = vmatprep.subr.mxu0 0.0
    %1423 = vmatpush2.msra.mxu0 0.0
    %1424 = vmatprep.subr.mxu0 0.0
    %1425 = vmatpush2.msra.mxu0 0.0
    %1426 = vmatprep.subr.mxu0 0.0
    %1427 = vmatpush2.msra.mxu0 0.0
    %1428 = vmatprep.mubr.f32.mxu0 0.0
    %1429 = vmatmul.mubr.f32.gmra.mxu0 %v1359
    %v1430 = vpop.f32.mrf.mxu0
    %v1431 = vadd.f32 0.0, %v1430
    %v1432 = vpop.f32.mrf.mxu0
    %1433 = vmatprep.mubr.f32.mxu0 0.0
    %1434 = vmatmul.mubr.f32.gmra.mxu0 %v1362
    %v1435 = vpop.f32.mrf.mxu0
    %v1436 = vadd.f32 0.0, %v1435
    %v1437 = vpop.f32.mrf.mxu0
    %1438 = vdwg.mxu0
    %v1439 = vadd.f32 %v1016, %v1431
    %v1440 = vadd.f32 %v1021, %v1436
    %1441 = vrot.lane.b32.xlu0 %v177, 104
    %v1442 = vpop.permute.xlu0 %1441
    %1443 = vrot.lane.b32.xlu0 %v177, 72
    %v1444 = vpop.permute.xlu0 %1443
    %v1445 = vsel %vm198, %v1442, 0
    %v1447 = vsel %vm198, %v1444, 0
    %1449 = vmatprep.subr.mxu0 0.0
    %1450 = vmatpush1.xpose.msra.mxu0 0.0
    %1451 = vmatprep.subr.mxu0 0.0
    %1452 = vmatpush1.xpose.msra.mxu0 0.0
    %1453 = vmatprep.subr.mxu0 0.0
    %1454 = vmatpush1.xpose.msra.mxu0 0.0
    %1455 = vmatprep.subr.mxu0 0.0
    %1456 = vmatpush1.xpose.msra.mxu0 0.0
    %1457 = vmatprep.subr.mxu0 0.0
    %1458 = vmatpush1.xpose.msra.mxu0 0.0
    %1459 = vmatprep.subr.mxu0 0.0
    %1460 = vmatpush1.xpose.msra.mxu0 0.0
    %1461 = vmatprep.subr.mxu0 0.0
    %1462 = vmatpush1.xpose.msra.mxu0 0.0
    %1463 = vmatprep.subr.mxu0 0.0
    %1464 = vmatpush1.xpose.msra.mxu0 0.0
    %1465 = vmatprep.subr.mxu0 0.0
    %1466 = vmatpush1.xpose.msra.mxu0 0.0
    %1467 = vmatprep.subr.mxu0 0.0
    %1468 = vmatpush1.xpose.msra.mxu0 0.0
    %1469 = vmatprep.subr.mxu0 0.0
    %1470 = vmatpush1.xpose.msra.mxu0 0.0
    %1471 = vmatprep.subr.mxu0 0.0
    %1472 = vmatpush1.xpose.msra.mxu0 0.0
    %1473 = vmatprep.subr.mxu0 0.0
    %1474 = vmatpush1.xpose.msra.mxu0 0.0
    %1475 = vmatprep.subr.mxu0 0.0
    %1476 = vmatpush1.xpose.msra.mxu0 0.0
    %1477 = vmatprep.subr.mxu0 0.0
    %1478 = vmatpush1.xpose.msra.mxu0 0.0
    %1479 = vmatprep.subr.mxu0 0.0
    %1480 = vmatpush1.xpose.msra.mxu0 %v1447
    %1481 = vmatprep.subr.mxu0 0.0
    %1482 = vmatpush2.xpose.msra.mxu0 0.0
    %1483 = vmatprep.subr.mxu0 0.0
    %1484 = vmatpush2.xpose.msra.mxu0 0.0
    %1485 = vmatprep.subr.mxu0 0.0
    %1486 = vmatpush2.xpose.msra.mxu0 0.0
    %1487 = vmatprep.subr.mxu0 0.0
    %1488 = vmatpush2.xpose.msra.mxu0 0.0
    %1489 = vmatprep.subr.mxu0 0.0
    %1490 = vmatpush2.xpose.msra.mxu0 0.0
    %1491 = vmatprep.subr.mxu0 0.0
    %1492 = vmatpush2.xpose.msra.mxu0 0.0
    %1493 = vmatprep.subr.mxu0 0.0
    %1494 = vmatpush2.xpose.msra.mxu0 0.0
    %1495 = vmatprep.subr.mxu0 0.0
    %1496 = vmatpush2.xpose.msra.mxu0 0.0
    %1497 = vmatprep.subr.mxu0 0.0
    %1498 = vmatpush2.xpose.msra.mxu0 0.0
    %1499 = vmatprep.subr.mxu0 0.0
    %1500 = vmatpush2.xpose.msra.mxu0 0.0
    %1501 = vmatprep.subr.mxu0 0.0
    %1502 = vmatpush2.xpose.msra.mxu0 0.0
    %1503 = vmatprep.subr.mxu0 0.0
    %1504 = vmatpush2.xpose.msra.mxu0 0.0
    %1505 = vmatprep.subr.mxu0 0.0
    %1506 = vmatpush2.xpose.msra.mxu0 0.0
    %1507 = vmatprep.subr.mxu0 0.0
    %1508 = vmatpush2.xpose.msra.mxu0 0.0
    %1509 = vmatprep.subr.mxu0 0.0
    %1510 = vmatpush2.xpose.msra.mxu0 0.0
    %1511 = vmatprep.subr.mxu0 0.0
    %1512 = vmatpush2.xpose.msra.mxu0 0.0
    %1513 = vmatprep.mubr.f32.mxu0 0.0
    %1514 = vmatmul.mubr.f32.gmra.mxu0 %v1445
    %v1515 = vpop.f32.mrf.mxu0
    %v1516 = vadd.f32 0.0, %v1515
    %v1517 = vpop.f32.mrf.mxu0
    %1518 = vdwg.mxu0
    %1519 = vrot.lane.b32.xlu0 %v182, 104
    %v1520 = vpop.permute.xlu0 %1519
    %1521 = vrot.lane.b32.xlu0 %v182, 72
    %v1522 = vpop.permute.xlu0 %1521
    %v1523 = vsel %vm198, %v1520, 0
    %v1525 = vsel %vm198, %v1522, 0
    %1527 = vmatprep.subr.mxu0 0.0
    %1528 = vmatpush1.xpose.msra.mxu0 0.0
    %1529 = vmatprep.subr.mxu0 0.0
    %1530 = vmatpush1.xpose.msra.mxu0 0.0
    %1531 = vmatprep.subr.mxu0 0.0
    %1532 = vmatpush1.xpose.msra.mxu0 0.0
    %1533 = vmatprep.subr.mxu0 0.0
    %1534 = vmatpush1.xpose.msra.mxu0 0.0
    %1535 = vmatprep.subr.mxu0 0.0
    %1536 = vmatpush1.xpose.msra.mxu0 0.0
    %1537 = vmatprep.subr.mxu0 0.0
    %1538 = vmatpush1.xpose.msra.mxu0 0.0
    %1539 = vmatprep.subr.mxu0 0.0
    %1540 = vmatpush1.xpose.msra.mxu0 0.0
    %1541 = vmatprep.subr.mxu0 0.0
    %1542 = vmatpush1.xpose.msra.mxu0 0.0
    %1543 = vmatprep.subr.mxu0 0.0
    %1544 = vmatpush1.xpose.msra.mxu0 0.0
    %1545 = vmatprep.subr.mxu0 0.0
    %1546 = vmatpush1.xpose.msra.mxu0 0.0
    %1547 = vmatprep.subr.mxu0 0.0
    %1548 = vmatpush1.xpose.msra.mxu0 0.0
    %1549 = vmatprep.subr.mxu0 0.0
    %1550 = vmatpush1.xpose.msra.mxu0 0.0
    %1551 = vmatprep.subr.mxu0 0.0
    %1552 = vmatpush1.xpose.msra.mxu0 0.0
    %1553 = vmatprep.subr.mxu0 0.0
    %1554 = vmatpush1.xpose.msra.mxu0 0.0
    %1555 = vmatprep.subr.mxu0 0.0
    %1556 = vmatpush1.xpose.msra.mxu0 0.0
    %1557 = vmatprep.subr.mxu0 0.0
    %1558 = vmatpush1.xpose.msra.mxu0 %v1525
    %1559 = vmatprep.subr.mxu0 0.0
    %1560 = vmatpush2.xpose.msra.mxu0 0.0
    %1561 = vmatprep.subr.mxu0 0.0
    %1562 = vmatpush2.xpose.msra.mxu0 0.0
    %1563 = vmatprep.subr.mxu0 0.0
    %1564 = vmatpush2.xpose.msra.mxu0 0.0
    %1565 = vmatprep.subr.mxu0 0.0
    %1566 = vmatpush2.xpose.msra.mxu0 0.0
    %1567 = vmatprep.subr.mxu0 0.0
    %1568 = vmatpush2.xpose.msra.mxu0 0.0
    %1569 = vmatprep.subr.mxu0 0.0
    %1570 = vmatpush2.xpose.msra.mxu0 0.0
    %1571 = vmatprep.subr.mxu0 0.0
    %1572 = vmatpush2.xpose.msra.mxu0 0.0
    %1573 = vmatprep.subr.mxu0 0.0
    %1574 = vmatpush2.xpose.msra.mxu0 0.0
    %1575 = vmatprep.subr.mxu0 0.0
    %1576 = vmatpush2.xpose.msra.mxu0 0.0
    %1577 = vmatprep.subr.mxu0 0.0
    %1578 = vmatpush2.xpose.msra.mxu0 0.0
    %1579 = vmatprep.subr.mxu0 0.0
    %1580 = vmatpush2.xpose.msra.mxu0 0.0
    %1581 = vmatprep.subr.mxu0 0.0
    %1582 = vmatpush2.xpose.msra.mxu0 0.0
    %1583 = vmatprep.subr.mxu0 0.0
    %1584 = vmatpush2.xpose.msra.mxu0 0.0
    %1585 = vmatprep.subr.mxu0 0.0
    %1586 = vmatpush2.xpose.msra.mxu0 0.0
    %1587 = vmatprep.subr.mxu0 0.0
    %1588 = vmatpush2.xpose.msra.mxu0 0.0
    %1589 = vmatprep.subr.mxu0 0.0
    %1590 = vmatpush2.xpose.msra.mxu0 0.0
    %1591 = vmatprep.mubr.f32.mxu0 0.0
    %1592 = vmatmul.mubr.f32.gmra.mxu0 %v1523
    %v1593 = vpop.f32.mrf.mxu0
    %v1594 = vadd.f32 0.0, %v1593
    %v1595 = vpop.f32.mrf.mxu0
    %1596 = vdwg.mxu0
    %v1597 = vmul.f32 %v1516, 0.17677669
    %v1598 = vmul.f32 %v1594, 0.17677669
    %v1599 = vadd.f32 %v1597, %v190
    %v1600 = vadd.f32 %v1598, %v190
    %v1601 = vsel %vm198, %v1599, -inf
    %1602 = vmax.xlane.f32.xlu0 %v1601
    %v1603 = vpop.xlane.xlu0 %1602
    %v1604 = vsel %vm198, %v1600, -inf
    %1605 = vmax.xlane.f32.xlu0 %v1604
    %v1606 = vpop.xlane.xlu0 %1605
    %v1607 = vsub.f32 %v1599, %v1603
    %v1608 = vsub.f32 %v1600, %v1606
    %v1609 = vmul.f32 %v1607, 1.442695
    %v1610 = vpow.pop %v1609
    %v1611 = vmul.f32 %v1608, 1.442695
    %v1612 = vpow.pop %v1611
    %v1613 = vsel %vm198, %v1610, 0.0
    %1614 = vadd.xlane.f32.xlu0 %v1613
    %v1615 = vpop.xlane.xlu0 %1614
    %v1616 = vsel %vm198, %v1612, 0.0
    %1617 = vadd.xlane.f32.xlu0 %v1616
    %v1618 = vpop.xlane.xlu0 %1617
    %v1619 = vrcp.pop %v1615
    %v1620 = vmul.f32 %v1610, %v1619
    %v1621 = vrcp.pop %v1618
    %v1622 = vmul.f32 %v1612, %v1621
    %1623 = vrot.lane.b32.xlu0 %v177, 40
    %v1624 = vpop.permute.xlu0 %1623
    %v1627 = vsel %vm198, %v1620, 0
    %1629 = vmatprep.subr.mxu0 0.0
    %1630 = vmatpush1.msra.mxu0 0.0
    %1631 = vmatprep.subr.mxu0 0.0
    %1632 = vmatpush1.msra.mxu0 0.0
    %1633 = vmatprep.subr.mxu0 0.0
    %1634 = vmatpush1.msra.mxu0 0.0
    %1635 = vmatprep.subr.mxu0 0.0
    %1636 = vmatpush1.msra.mxu0 0.0
    %1637 = vmatprep.subr.mxu0 0.0
    %1638 = vmatpush1.msra.mxu0 0.0
    %1639 = vmatprep.subr.mxu0 0.0
    %1640 = vmatpush1.msra.mxu0 0.0
    %1641 = vmatprep.subr.mxu0 0.0
    %1642 = vmatpush1.msra.mxu0 0.0
    %1643 = vmatprep.subr.mxu0 0.0
    %1644 = vmatpush1.msra.mxu0 0.0
    %1645 = vmatprep.subr.mxu0 0.0
    %1646 = vmatpush1.msra.mxu0 0.0
    %1647 = vmatprep.subr.mxu0 0.0
    %1648 = vmatpush1.msra.mxu0 0.0
    %1649 = vmatprep.subr.mxu0 0.0
    %1650 = vmatpush1.msra.mxu0 0.0
    %1651 = vmatprep.subr.mxu0 0.0
    %1652 = vmatpush1.msra.mxu0 0.0
    %1653 = vmatprep.subr.mxu0 0.0
    %1654 = vmatpush1.msra.mxu0 0.0
    %1655 = vmatprep.subr.mxu0 0.0
    %1656 = vmatpush1.msra.mxu0 0.0
    %1657 = vmatprep.subr.mxu0 0.0
    %1658 = vmatpush1.msra.mxu0 0.0
    %1659 = vmatprep.subr.mxu0 0.0
    %1660 = vmatpush1.msra.mxu0 %v1624
    %1661 = vmatprep.subr.mxu0 0.0
    %1662 = vmatpush2.msra.mxu0 0.0
    %1663 = vmatprep.subr.mxu0 0.0
    %1664 = vmatpush2.msra.mxu0 0.0
    %1665 = vmatprep.subr.mxu0 0.0
    %1666 = vmatpush2.msra.mxu0 0.0
    %1667 = vmatprep.subr.mxu0 0.0
    %1668 = vmatpush2.msra.mxu0 0.0
    %1669 = vmatprep.subr.mxu0 0.0
    %1670 = vmatpush2.msra.mxu0 0.0
    %1671 = vmatprep.subr.mxu0 0.0
    %1672 = vmatpush2.msra.mxu0 0.0
    %1673 = vmatprep.subr.mxu0 0.0
    %1674 = vmatpush2.msra.mxu0 0.0
    %1675 = vmatprep.subr.mxu0 0.0
    %1676 = vmatpush2.msra.mxu0 0.0
    %1677 = vmatprep.subr.mxu0 0.0
    %1678 = vmatpush2.msra.mxu0 0.0
    %1679 = vmatprep.subr.mxu0 0.0
    %1680 = vmatpush2.msra.mxu0 0.0
    %1681 = vmatprep.subr.mxu0 0.0
    %1682 = vmatpush2.msra.mxu0 0.0
    %1683 = vmatprep.subr.mxu0 0.0
    %1684 = vmatpush2.msra.mxu0 0.0
    %1685 = vmatprep.subr.mxu0 0.0
    %1686 = vmatpush2.msra.mxu0 0.0
    %1687 = vmatprep.subr.mxu0 0.0
    %1688 = vmatpush2.msra.mxu0 0.0
    %1689 = vmatprep.subr.mxu0 0.0
    %1690 = vmatpush2.msra.mxu0 0.0
    %1691 = vmatprep.subr.mxu0 0.0
    %1692 = vmatpush2.msra.mxu0 0.0
    %1693 = vmatprep.mubr.f32.mxu0 0.0
    %1694 = vmatmul.mubr.f32.gmra.mxu0 %v1627
    %v1695 = vpop.f32.mrf.mxu0
    %v1696 = vadd.f32 0.0, %v1695
    %v1697 = vpop.f32.mrf.mxu0
    %1698 = vdwg.mxu0
    %1699 = vrot.lane.b32.xlu0 %v182, 40
    %v1700 = vpop.permute.xlu0 %1699
    %v1703 = vsel %vm198, %v1622, 0
    %1705 = vmatprep.subr.mxu0 0.0
    %1706 = vmatpush1.msra.mxu0 0.0
    %1707 = vmatprep.subr.mxu0 0.0
    %1708 = vmatpush1.msra.mxu0 0.0
    %1709 = vmatprep.subr.mxu0 0.0
    %1710 = vmatpush1.msra.mxu0 0.0
    %1711 = vmatprep.subr.mxu0 0.0
    %1712 = vmatpush1.msra.mxu0 0.0
    %1713 = vmatprep.subr.mxu0 0.0
    %1714 = vmatpush1.msra.mxu0 0.0
    %1715 = vmatprep.subr.mxu0 0.0
    %1716 = vmatpush1.msra.mxu0 0.0
    %1717 = vmatprep.subr.mxu0 0.0
    %1718 = vmatpush1.msra.mxu0 0.0
    %1719 = vmatprep.subr.mxu0 0.0
    %1720 = vmatpush1.msra.mxu0 0.0
    %1721 = vmatprep.subr.mxu0 0.0
    %1722 = vmatpush1.msra.mxu0 0.0
    %1723 = vmatprep.subr.mxu0 0.0
    %1724 = vmatpush1.msra.mxu0 0.0
    %1725 = vmatprep.subr.mxu0 0.0
    %1726 = vmatpush1.msra.mxu0 0.0
    %1727 = vmatprep.subr.mxu0 0.0
    %1728 = vmatpush1.msra.mxu0 0.0
    %1729 = vmatprep.subr.mxu0 0.0
    %1730 = vmatpush1.msra.mxu0 0.0
    %1731 = vmatprep.subr.mxu0 0.0
    %1732 = vmatpush1.msra.mxu0 0.0
    %1733 = vmatprep.subr.mxu0 0.0
    %1734 = vmatpush1.msra.mxu0 0.0
    %1735 = vmatprep.subr.mxu0 0.0
    %1736 = vmatpush1.msra.mxu0 %v1700
    %1737 = vmatprep.subr.mxu0 0.0
    %1738 = vmatpush2.msra.mxu0 0.0
    %1739 = vmatprep.subr.mxu0 0.0
    %1740 = vmatpush2.msra.mxu0 0.0
    %1741 = vmatprep.subr.mxu0 0.0
    %1742 = vmatpush2.msra.mxu0 0.0
    %1743 = vmatprep.subr.mxu0 0.0
    %1744 = vmatpush2.msra.mxu0 0.0
    %1745 = vmatprep.subr.mxu0 0.0
    %1746 = vmatpush2.msra.mxu0 0.0
    %1747 = vmatprep.subr.mxu0 0.0
    %1748 = vmatpush2.msra.mxu0 0.0
    %1749 = vmatprep.subr.mxu0 0.0
    %1750 = vmatpush2.msra.mxu0 0.0
    %1751 = vmatprep.subr.mxu0 0.0
    %1752 = vmatpush2.msra.mxu0 0.0
    %1753 = vmatprep.subr.mxu0 0.0
    %1754 = vmatpush2.msra.mxu0 0.0
    %1755 = vmatprep.subr.mxu0 0.0
    %1756 = vmatpush2.msra.mxu0 0.0
    %1757 = vmatprep.subr.mxu0 0.0
    %1758 = vmatpush2.msra.mxu0 0.0
    %1759 = vmatprep.subr.mxu0 0.0
    %1760 = vmatpush2.msra.mxu0 0.0
    %1761 = vmatprep.subr.mxu0 0.0
    %1762 = vmatpush2.msra.mxu0 0.0
    %1763 = vmatprep.subr.mxu0 0.0
    %1764 = vmatpush2.msra.mxu0 0.0
    %1765 = vmatprep.subr.mxu0 0.0
    %1766 = vmatpush2.msra.mxu0 0.0
    %1767 = vmatprep.subr.mxu0 0.0
    %1768 = vmatpush2.msra.mxu0 0.0
    %1769 = vmatprep.mubr.f32.mxu0 0.0
    %1770 = vmatmul.mubr.f32.gmra.mxu0 %v1703
    %v1771 = vpop.f32.mrf.mxu0
    %v1772 = vadd.f32 0.0, %v1771
    %v1773 = vpop.f32.mrf.mxu0
    %1774 = vdwg.mxu0
    %v1776 = vsel %vm198, %v1696, 0
    %v1779 = vsel %vm198, %v1772, 0
    %1781 = vmatprep.subr.mxu0 0.0
    %1782 = vmatpush1.msra.mxu0 0.0
    %1783 = vmatprep.subr.mxu0 0.0
    %1784 = vmatpush1.msra.mxu0 0.0
    %1785 = vmatprep.subr.mxu0 0.0
    %1786 = vmatpush1.msra.mxu0 0.0
    %1787 = vmatprep.subr.mxu0 0.0
    %1788 = vmatpush1.msra.mxu0 0.0
    %1789 = vmatprep.subr.mxu0 0.0
    %1790 = vmatpush1.msra.mxu0 0.0
    %1791 = vmatprep.subr.mxu0 0.0
    %1792 = vmatpush1.msra.mxu0 0.0
    %1793 = vmatprep.subr.mxu0 0.0
    %1794 = vmatpush1.msra.mxu0 0.0
    %1795 = vmatprep.subr.mxu0 0.0
    %1796 = vmatpush1.msra.mxu0 0.0
    %1797 = vmatprep.subr.mxu0 0.0
    %1798 = vmatpush1.msra.mxu0 0.0
    %1799 = vmatprep.subr.mxu0 0.0
    %1800 = vmatpush1.msra.mxu0 0.0
    %1801 = vmatprep.subr.mxu0 0.0
    %1802 = vmatpush1.msra.mxu0 0.0
    %1803 = vmatprep.subr.mxu0 0.0
    %1804 = vmatpush1.msra.mxu0 0.0
    %1805 = vmatprep.subr.mxu0 0.0
    %1806 = vmatpush1.msra.mxu0 0.0
    %1807 = vmatprep.subr.mxu0 0.0
    %1808 = vmatpush1.msra.mxu0 0.0
    %1809 = vmatprep.subr.mxu0 0.0
    %1810 = vmatpush1.msra.mxu0 0.0
    %1811 = vmatprep.subr.mxu0 0.0
    %1812 = vmatpush1.msra.mxu0 %v194
    %1813 = vmatprep.subr.mxu0 0.0
    %1814 = vmatpush2.msra.mxu0 0.0
    %1815 = vmatprep.subr.mxu0 0.0
    %1816 = vmatpush2.msra.mxu0 0.0
    %1817 = vmatprep.subr.mxu0 0.0
    %1818 = vmatpush2.msra.mxu0 0.0
    %1819 = vmatprep.subr.mxu0 0.0
    %1820 = vmatpush2.msra.mxu0 0.0
    %1821 = vmatprep.subr.mxu0 0.0
    %1822 = vmatpush2.msra.mxu0 0.0
    %1823 = vmatprep.subr.mxu0 0.0
    %1824 = vmatpush2.msra.mxu0 0.0
    %1825 = vmatprep.subr.mxu0 0.0
    %1826 = vmatpush2.msra.mxu0 0.0
    %1827 = vmatprep.subr.mxu0 0.0
    %1828 = vmatpush2.msra.mxu0 0.0
    %1829 = vmatprep.subr.mxu0 0.0
    %1830 = vmatpush2.msra.mxu0 0.0
    %1831 = vmatprep.subr.mxu0 0.0
    %1832 = vmatpush2.msra.mxu0 0.0
    %1833 = vmatprep.subr.mxu0 0.0
    %1834 = vmatpush2.msra.mxu0 0.0
    %1835 = vmatprep.subr.mxu0 0.0
    %1836 = vmatpush2.msra.mxu0 0.0
    %1837 = vmatprep.subr.mxu0 0.0
    %1838 = vmatpush2.msra.mxu0 0.0
    %1839 = vmatprep.subr.mxu0 0.0
    %1840 = vmatpush2.msra.mxu0 0.0
    %1841 = vmatprep.subr.mxu0 0.0
    %1842 = vmatpush2.msra.mxu0 0.0
    %1843 = vmatprep.subr.mxu0 0.0
    %1844 = vmatpush2.msra.mxu0 0.0
    %1845 = vmatprep.mubr.f32.mxu0 0.0
    %1846 = vmatmul.mubr.f32.gmra.mxu0 %v1776
    %v1847 = vpop.f32.mrf.mxu0
    %v1848 = vadd.f32 0.0, %v1847
    %v1849 = vpop.f32.mrf.mxu0
    %1850 = vmatprep.mubr.f32.mxu0 0.0
    %1851 = vmatmul.mubr.f32.gmra.mxu0 %v1779
    %v1852 = vpop.f32.mrf.mxu0
    %v1853 = vadd.f32 0.0, %v1852
    %v1854 = vpop.f32.mrf.mxu0
    %1855 = vdwg.mxu0
    %v1856 = vadd.f32 %v1439, %v1848
    %v1857 = vadd.f32 %v1440, %v1853
    %v1858 = vadd.f32 %v45, %v1856
    %v1859 = vadd.f32 %v46, %v1857
    %v1860 = vld [vmem:[%s6] sm:$0x1]
    %v1862 = vlaneseq
    %v1863 = vshrl.u32 %v1862, 7
    %v1864 = vsub.s32 0, %v1863
    %v1865 = vrot.slane %v1860, %v1864
    %v1867 = vadd.f32 %v1858, %v1865
    %v1868 = vadd.f32 %v1859, %v1865
    %v1869 = vld [vmem:[%s7] sm:$0x1]
    %v1870 = vld [vmem:[%s8] sm:$0x1]
    %v1871 = vsel %vm49, %v1867, 0.0
    %1872 = vadd.xlane.f32.xlu0 %v1871
    %v1873 = vpop.xlane.xlu0 %1872
    %v1874 = vsel %vm49, %v1868, 0.0
    %1875 = vadd.xlane.f32.xlu0 %v1874
    %v1876 = vpop.xlane.xlu0 %1875
    %v1877 = vmul.f32 %v1873, %v56
    %v1878 = vmul.f32 %v1876, %v56
    %v1879 = vsub.f32 %v1867, %v1877
    %v1880 = vsub.f32 %v1868, %v1878
    %v1881 = vmul.f32 %v1879, %v1879
    %v1882 = vmul.f32 %v1880, %v1880
    %v1883 = vsel %vm49, %v1881, 0.0
    %1884 = vadd.xlane.f32.xlu0 %v1883
    %v1885 = vpop.xlane.xlu0 %1884
    %v1886 = vsel %vm49, %v1882, 0.0
    %1887 = vadd.xlane.f32.xlu0 %v1886
    %v1888 = vpop.xlane.xlu0 %1887
    %v1889 = vmul.f32 %v1885, %v56
    %v1890 = vmul.f32 %v1888, %v56
    %v1891 = vadd.f32 %v1889, 1e-05
    %v1892 = vadd.f32 %v1890, 1e-05
    %v1893 = vrsqrt.pop %v1891
    %v1894 = vrsqrt.pop %v1892
    %v1895 = vmul.f32 %v1879, %v1893
    %v1896 = vmul.f32 %v1880, %v1894
    %v1898 = vlaneseq
    %v1899 = vshrl.u32 %v1898, 7
    %v1900 = vsub.s32 0, %v1899
    %v1901 = vrot.slane %v1869, %v1900
    %v1903 = vmul.f32 %v1895, %v1901
    %v1904 = vmul.f32 %v1896, %v1901
    %v1906 = vlaneseq
    %v1907 = vshrl.u32 %v1906, 7
    %v1908 = vsub.s32 0, %v1907
    %v1909 = vrot.slane %v1870, %v1908
    %v1911 = vadd.f32 %v1903, %v1909
    %v1912 = vadd.f32 %v1904, %v1909
    %v1913 = vld [vmem:[%s9] sm:$0xff]
    %v1914 = vld [vmem:[%s9 + $0x8] sm:$0xff]
    %v1915 = vld [vmem:[%s9 + $0x10] sm:$0xff]
    %v1916 = vld [vmem:[%s9 + $0x18] sm:$0xff]
    %v1917 = vld [vmem:[%s10] sm:$0x1]
    %v1919 = vlaneseq
    %v1920 = vshrl.u32 %v1919, 7
    %v1921 = vsub.s32 0, %v1920
    %v1922 = vrot.slane %v1917, %v1921
    %v1925 = vsel %vm49, %v1911, 0
    %v1928 = vsel %vm49, %v1912, 0
    %1930 = vmatprep.subr.mxu0 0.0
    %1931 = vmatpush1.msra.mxu0 0.0
    %1932 = vmatprep.subr.mxu0 0.0
    %1933 = vmatpush1.msra.mxu0 0.0
    %1934 = vmatprep.subr.mxu0 0.0
    %1935 = vmatpush1.msra.mxu0 0.0
    %1936 = vmatprep.subr.mxu0 0.0
    %1937 = vmatpush1.msra.mxu0 0.0
    %1938 = vmatprep.subr.mxu0 0.0
    %1939 = vmatpush1.msra.mxu0 0.0
    %1940 = vmatprep.subr.mxu0 0.0
    %1941 = vmatpush1.msra.mxu0 0.0
    %1942 = vmatprep.subr.mxu0 0.0
    %1943 = vmatpush1.msra.mxu0 0.0
    %1944 = vmatprep.subr.mxu0 0.0
    %1945 = vmatpush1.msra.mxu0 0.0
    %1946 = vmatprep.subr.mxu0 0.0
    %1947 = vmatpush1.msra.mxu0 0.0
    %1948 = vmatprep.subr.mxu0 0.0
    %1949 = vmatpush1.msra.mxu0 0.0
    %1950 = vmatprep.subr.mxu0 0.0
    %1951 = vmatpush1.msra.mxu0 0.0
    %1952 = vmatprep.subr.mxu0 0.0
    %1953 = vmatpush1.msra.mxu0 0.0
    %1954 = vmatprep.subr.mxu0 0.0
    %1955 = vmatpush1.msra.mxu0 %v1916
    %1956 = vmatprep.subr.mxu0 0.0
    %1957 = vmatpush1.msra.mxu0 %v1915
    %1958 = vmatprep.subr.mxu0 0.0
    %1959 = vmatpush1.msra.mxu0 %v1914
    %1960 = vmatprep.subr.mxu0 0.0
    %1961 = vmatpush1.msra.mxu0 %v1913
    %1962 = vmatprep.subr.mxu0 0.0
    %1963 = vmatpush2.msra.mxu0 0.0
    %1964 = vmatprep.subr.mxu0 0.0
    %1965 = vmatpush2.msra.mxu0 0.0
    %1966 = vmatprep.subr.mxu0 0.0
    %1967 = vmatpush2.msra.mxu0 0.0
    %1968 = vmatprep.subr.mxu0 0.0
    %1969 = vmatpush2.msra.mxu0 0.0
    %1970 = vmatprep.subr.mxu0 0.0
    %1971 = vmatpush2.msra.mxu0 0.0
    %1972 = vmatprep.subr.mxu0 0.0
    %1973 = vmatpush2.msra.mxu0 0.0
    %1974 = vmatprep.subr.mxu0 0.0
    %1975 = vmatpush2.msra.mxu0 0.0
    %1976 = vmatprep.subr.mxu0 0.0
    %1977 = vmatpush2.msra.mxu0 0.0
    %1978 = vmatprep.subr.mxu0 0.0
    %1979 = vmatpush2.msra.mxu0 0.0
    %1980 = vmatprep.subr.mxu0 0.0
    %1981 = vmatpush2.msra.mxu0 0.0
    %1982 = vmatprep.subr.mxu0 0.0
    %1983 = vmatpush2.msra.mxu0 0.0
    %1984 = vmatprep.subr.mxu0 0.0
    %1985 = vmatpush2.msra.mxu0 0.0
    %1986 = vmatprep.subr.mxu0 0.0
    %1987 = vmatpush2.msra.mxu0 0.0
    %1988 = vmatprep.subr.mxu0 0.0
    %1989 = vmatpush2.msra.mxu0 0.0
    %1990 = vmatprep.subr.mxu0 0.0
    %1991 = vmatpush2.msra.mxu0 0.0
    %1992 = vmatprep.subr.mxu0 0.0
    %1993 = vmatpush2.msra.mxu0 0.0
    %1994 = vmatprep.mubr.f32.mxu0 0.0
    %1995 = vmatmul.mubr.f32.gmra.mxu0 %v1925
    %v1996 = vpop.f32.mrf.mxu0
    %v1997 = vadd.f32 %v1922, %v1996
    %v1998 = vpop.f32.mrf.mxu0
    %1999 = vmatprep.mubr.f32.mxu0 0.0
    %2000 = vmatmul.mubr.f32.gmra.mxu0 %v1928
    %v2001 = vpop.f32.mrf.mxu0
    %v2002 = vadd.f32 %v1922, %v2001
    %v2003 = vpop.f32.mrf.mxu0
    %2004 = vdwg.mxu0
    %v2005 = vmax.f32 %v1997, 0.0
    %v2006 = vmax.f32 %v2002, 0.0
    %v2007 = vld [vmem:[%s11] sm:$0xff]
    %v2008 = vld [vmem:[%s11 + $0x8] sm:$0xff]
    %v2009 = vld [vmem:[%s11 + $0x10] sm:$0xff]
    %v2010 = vld [vmem:[%s11 + $0x18] sm:$0xff]
    %v2011 = vld [vmem:[%s11 + $0x20] sm:$0xff]
    %v2012 = vld [vmem:[%s11 + $0x28] sm:$0xff]
    %v2013 = vld [vmem:[%s11 + $0x30] sm:$0xff]
    %v2014 = vld [vmem:[%s11 + $0x38] sm:$0xff]
    %v2015 = vld [vmem:[%s11 + $0x40] sm:$0xff]
    %v2016 = vld [vmem:[%s11 + $0x48] sm:$0xff]
    %v2017 = vld [vmem:[%s11 + $0x50] sm:$0xff]
    %v2018 = vld [vmem:[%s11 + $0x58] sm:$0xff]
    %v2019 = vld [vmem:[%s11 + $0x60] sm:$0xff]
    %v2020 = vld [vmem:[%s11 + $0x68] sm:$0xff]
    %v2021 = vld [vmem:[%s11 + $0x70] sm:$0xff]
    %v2022 = vld [vmem:[%s11 + $0x78] sm:$0xff]
    %v2023 = vld [vmem:[%s12] sm:$0x1]
    %v2025 = vlaneseq
    %v2026 = vshrl.u32 %v2025, 7
    %v2027 = vsub.s32 0, %v2026
    %v2028 = vrot.slane %v2023, %v2027
    %2030 = vmatprep.subr.mxu0 0.0
    %2031 = vmatpush1.msra.mxu0 %v2022
    %2032 = vmatprep.subr.mxu0 0.0
    %2033 = vmatpush1.msra.mxu0 %v2021
    %2034 = vmatprep.subr.mxu0 0.0
    %2035 = vmatpush1.msra.mxu0 %v2020
    %2036 = vmatprep.subr.mxu0 0.0
    %2037 = vmatpush1.msra.mxu0 %v2019
    %2038 = vmatprep.subr.mxu0 0.0
    %2039 = vmatpush1.msra.mxu0 %v2018
    %2040 = vmatprep.subr.mxu0 0.0
    %2041 = vmatpush1.msra.mxu0 %v2017
    %2042 = vmatprep.subr.mxu0 0.0
    %2043 = vmatpush1.msra.mxu0 %v2016
    %2044 = vmatprep.subr.mxu0 0.0
    %2045 = vmatpush1.msra.mxu0 %v2015
    %2046 = vmatprep.subr.mxu0 0.0
    %2047 = vmatpush1.msra.mxu0 %v2014
    %2048 = vmatprep.subr.mxu0 0.0
    %2049 = vmatpush1.msra.mxu0 %v2013
    %2050 = vmatprep.subr.mxu0 0.0
    %2051 = vmatpush1.msra.mxu0 %v2012
    %2052 = vmatprep.subr.mxu0 0.0
    %2053 = vmatpush1.msra.mxu0 %v2011
    %2054 = vmatprep.subr.mxu0 0.0
    %2055 = vmatpush1.msra.mxu0 %v2010
    %2056 = vmatprep.subr.mxu0 0.0
    %2057 = vmatpush1.msra.mxu0 %v2009
    %2058 = vmatprep.subr.mxu0 0.0
    %2059 = vmatpush1.msra.mxu0 %v2008
    %2060 = vmatprep.subr.mxu0 0.0
    %2061 = vmatpush1.msra.mxu0 %v2007
    %2062 = vmatprep.subr.mxu0 0.0
    %2063 = vmatpush2.msra.mxu0 0.0
    %2064 = vmatprep.subr.mxu0 0.0
    %2065 = vmatpush2.msra.mxu0 0.0
    %2066 = vmatprep.subr.mxu0 0.0
    %2067 = vmatpush2.msra.mxu0 0.0
    %2068 = vmatprep.subr.mxu0 0.0
    %2069 = vmatpush2.msra.mxu0 0.0
    %2070 = vmatprep.subr.mxu0 0.0
    %2071 = vmatpush2.msra.mxu0 0.0
    %2072 = vmatprep.subr.mxu0 0.0
    %2073 = vmatpush2.msra.mxu0 0.0
    %2074 = vmatprep.subr.mxu0 0.0
    %2075 = vmatpush2.msra.mxu0 0.0
    %2076 = vmatprep.subr.mxu0 0.0
    %2077 = vmatpush2.msra.mxu0 0.0
    %2078 = vmatprep.subr.mxu0 0.0
    %2079 = vmatpush2.msra.mxu0 0.0
    %2080 = vmatprep.subr.mxu0 0.0
    %2081 = vmatpush2.msra.mxu0 0.0
    %2082 = vmatprep.subr.mxu0 0.0
    %2083 = vmatpush2.msra.mxu0 0.0
    %2084 = vmatprep.subr.mxu0 0.0
    %2085 = vmatpush2.msra.mxu0 0.0
    %2086 = vmatprep.subr.mxu0 0.0
    %2087 = vmatpush2.msra.mxu0 0.0
    %2088 = vmatprep.subr.mxu0 0.0
    %2089 = vmatpush2.msra.mxu0 0.0
    %2090 = vmatprep.subr.mxu0 0.0
    %2091 = vmatpush2.msra.mxu0 0.0
    %2092 = vmatprep.subr.mxu0 0.0
    %2093 = vmatpush2.msra.mxu0 0.0
    %2094 = vmatprep.mubr.f32.mxu0 0.0
    %2095 = vmatmul.mubr.f32.gmra.mxu0 %v2005
    %v2096 = vpop.f32.mrf.mxu0
    %v2097 = vadd.f32 %v2028, %v2096
    %v2098 = vpop.f32.mrf.mxu0
    %2099 = vmatprep.mubr.f32.mxu0 0.0
    %2100 = vmatmul.mubr.f32.gmra.mxu0 %v2006
    %v2101 = vpop.f32.mrf.mxu0
    %v2102 = vadd.f32 %v2028, %v2101
    %v2103 = vpop.f32.mrf.mxu0
    %2104 = vdwg.mxu0
    %v2105 = vadd.f32 %v1867, %v2097
    %v2106 = vadd.f32 %v1868, %v2102
    %2107 = vst.msk [vmem:[#allocation2] sm:$0xff] %vm49, %v2105
    %2108 = vst.msk [vmem:[#allocation2 + $0x8] sm:$0xff] %vm49, %v2106
    // Predicated region
    $region54: #{block_forward.1} parent=1 // pred_check
      _
    $region55: #{block_forward.1} parent=1 // pred_check_branch
      %2110 = sbr.rel (0) target = $region57
    $region56: #{block_forward.1} parent=1 // pred_region
      %s2112 = ssub.s32 256, 256
      %2113 = vsyncadd [#allocation3], %s2112
      %s2114 = sshll.u32 [#allocation2], 4
      %s2115 = int_to_ptr.vmem [resolvable:$true] %s2114
      %2120 = dma.vmem_to_hbm [thread:$0]  %s2115, 256, %s13, [#allocation3], 128, 128, 8
    $region57: #{block_forward.1} parent=1 // pred_fallthru
      _
    // Predicated region
    $region58: #{block_forward.1} parent=1 // pred_check
      _
    $region59: #{block_forward.1} parent=1 // pred_check_branch
      %2122 = sbr.rel (0) target = $region61
    $region60: #{block_forward.1} parent=1 // pred_region
      %2123 = dma.done [#allocation3], 256
    $region61: #{block_forward.1} parent=1 // pred_fallthru
      _
    %2124 = vsyncpa [#allocation3], 1

</llo_original>
